<compile_context>
chip_gen: v6e
topology: v6e:2x2x1
jax: 0.10.0
libtpu: 0.0.40
codegen_flags: <defaults>
</compile_context>

<pallas_src>
import numpy as np
import jax
import jax.numpy as jnp
from jax import lax
from jax.experimental import pallas as pl
from jax.experimental.pallas import tpu as pltpu

_SQRT2 = 1.4142135623730951
_EPS = 1e-5

# tap -> (polyphase plane, row offset, col offset) for a 3x3 / stride-2 / pad-1
# conv expressed on the four polyphase planes of the input:
#   plane 0 = x[0::2, 0::2]   plane 1 = x[0::2, 1::2]
#   plane 2 = x[1::2, 0::2]   plane 3 = x[1::2, 1::2]
# each plane is pre-padded with one zero row on top and one zero col on the
# left, so every tap is a contiguous (no stride) window of a plane.
_TAPS = []
for _di in range(3):
    for _dj in range(3):
        _p = (0 if _di == 1 else 2) + (0 if _dj == 1 else 1)
        _TAPS.append((_p, 0 if _di == 0 else 1, 0 if _dj == 0 else 1))


def _gelu_exact(x):
    # PyTorch nn.GELU() default = exact erf formulation.
    return 0.5 * x * (1.0 + lax.erf(x / _SQRT2))


def _gather_taps(xp):
    """xp: (4, Hn+1, Wn+1, Cin) padded polyphase planes -> (Hn*Wn, 9*Cin)."""
    Hn = xp.shape[1] - 1
    Wn = xp.shape[2] - 1
    taps = [xp[p, r0:r0 + Hn, c0:c0 + Wn, :] for (p, r0, c0) in _TAPS]
    pat = jnp.concatenate(taps, axis=-1)          # (Hn, Wn, 9*Cin)
    # Wn is padded to a multiple of 8 by the wrapper -> this reshape is a free
    # vreg re-indexing (no relayout).
    return pat.reshape(Hn * Wn, pat.shape[-1])


# ----------------------- Pallas kernels -----------------------

def _stage1_kernel(xp_ref, w1_ref, s1_ref, t1_ref, o_ref):
    """Fused conv_path (implicit-GEMM conv + BN + GELU) and Haar DWT."""
    xp = xp_ref[...]                                    # (4, Ho+1, Wop+1, C) f32
    Hn = xp.shape[1] - 1
    Wn = xp.shape[2] - 1
    C = xp.shape[3]
    M = Hn * Wn

    # conv_path: one bf16 MXU matmul over all 9 taps, f32 accumulate.
    patches = _gather_taps(xp).astype(jnp.bfloat16)     # (M, 9C)
    acc = jnp.dot(patches, w1_ref[...], preferred_element_type=jnp.float32)
    y1 = _gelu_exact(acc * s1_ref[...] + t1_ref[...])   # (M, 4C) f32

    # DW_path: 1-level Haar DWT (mode='zero') directly on the polyphase planes.
    a = xp[0, 1:, 1:, :].reshape(M, C)
    b = xp[1, 1:, 1:, :].reshape(M, C)
    c = xp[2, 1:, 1:, :].reshape(M, C)
    d = xp[3, 1:, 1:, :].reshape(M, C)
    ll = 0.5 * (a + b + c + d)          # LL
    h0 = 0.5 * (a + b - c - d)          # (loW, hiH)  = yH[0][:, :, 0]
    h1 = 0.5 * (a - b + c - d)          # (hiW, loH)  = yH[0][:, :, 1]
    h2 = 0.5 * (a - b - c + d)          # (hiW, hiH)  = yH[0][:, :, 2]

    # channel order of the PyTorch concat: [conv_path, LL, H0, H1, H2]
    o_ref[...] = jnp.concatenate([y1, ll, h0, h1, h2], axis=-1)   # (M, 8C)


def _stage2_kernel(xp_ref, w2_ref, s2_ref, t2_ref, o_ref):
    """combine_conv: both groups fused via a block-diagonal weight, + bias + BN."""
    xp = xp_ref[...]                                    # (4, H4+1, W4p+1, 8C)
    patches = _gather_taps(xp).astype(jnp.bfloat16)     # (M2, 72C)
    acc = jnp.dot(patches, w2_ref[...], preferred_element_type=jnp.float32)
    o_ref[...] = acc * s2_ref[...] + t2_ref[...]        # bias & BN folded in s/t


# ----------------------- pallas_call wrappers -----------------------

_COMPILER_PARAMS = pltpu.CompilerParams(
    dimension_semantics=("parallel",),          # batch axis -> megacore on v7x
    vmem_limit_bytes=64 * 1024 * 1024,
)


def _stage1_call(xpoly, w1, s1, t1):
    B, _, Hp1, Wp1, C = xpoly.shape
    M = (Hp1 - 1) * (Wp1 - 1)
    K, O1 = w1.shape
    return pl.pallas_call(
        _stage1_kernel,
        out_shape=jax.ShapeDtypeStruct((B, M, 2 * O1), jnp.float32),
        grid=(B,),
        in_specs=[
            pl.BlockSpec((None, 4, Hp1, Wp1, C), lambda b: (b, 0, 0, 0, 0)),
            pl.BlockSpec((K, O1), lambda b: (0, 0)),
            pl.BlockSpec((1, O1), lambda b: (0, 0)),
            pl.BlockSpec((1, O1), lambda b: (0, 0)),
        ],
        out_specs=pl.BlockSpec((None, M, 2 * O1), lambda b: (b, 0, 0)),
        compiler_params=_COMPILER_PARAMS,
    )(xpoly, w1, s1, t1)


def _stage2_call(xc_poly, w2, s2, t2):
    B, _, Hp1, Wp1, C8 = xc_poly.shape
    M = (Hp1 - 1) * (Wp1 - 1)
    K, E = w2.shape
    return pl.pallas_call(
        _stage2_kernel,
        out_shape=jax.ShapeDtypeStruct((B, M, E), jnp.float32),
        grid=(B,),
        in_specs=[
            pl.BlockSpec((None, 4, Hp1, Wp1, C8), lambda b: (b, 0, 0, 0, 0)),
            pl.BlockSpec((K, E), lambda b: (0, 0)),
            pl.BlockSpec((1, E), lambda b: (0, 0)),
            pl.BlockSpec((1, E), lambda b: (0, 0)),
        ],
        out_specs=pl.BlockSpec((None, M, E), lambda b: (b, 0, 0)),
        compiler_params=_COMPILER_PARAMS,
    )(xc_poly, w2, s2, t2)


# ----------------------- JAX glue (cheap layout prep only) -----------------------

def _round_up(v, m):
    return ((v + m - 1) // m) * m


def _polyphase_pad(x_nhwc, w_pad_to):
    """(B,H,W,Cc) NHWC, H and W even -> (B, 4, H//2 + 1, w_pad_to + 1, Cc)."""
    a = x_nhwc[:, 0::2, 0::2, :]
    b = x_nhwc[:, 0::2, 1::2, :]
    c = x_nhwc[:, 1::2, 0::2, :]
    d = x_nhwc[:, 1::2, 1::2, :]
    planes = jnp.stack([a, b, c, d], axis=1)            # (B, 4, Hh, Wh, Cc)
    Wh = planes.shape[3]
    return jnp.pad(planes,
                   ((0, 0), (0, 0), (1, 0), (1, w_pad_to - Wh), (0, 0)))


def _fold_bn(gamma, beta, mean, var):
    scale = gamma / jnp.sqrt(var + _EPS)
    return scale, beta - mean * scale


def _conv2_block_diag(w2, C):
    """Grouped (groups=2) 3x3 conv weight (E, 4C, 3, 3) -> (9*8C, E) block-diag."""
    E = w2.shape[0]
    Eg = E // 2
    C4, C8 = 4 * C, 8 * C
    out = jnp.zeros((9 * C8, E), dtype=w2.dtype)
    t = 0
    for di in range(3):
        for dj in range(3):
            out = out.at[t * C8:t * C8 + C4, :Eg].set(w2[:Eg, :, di, dj].T)
            out = out.at[t * C8 + C4:(t + 1) * C8, Eg:].set(w2[Eg:, :, di, dj].T)
            t += 1
    return out


def dw_embedded_forward(x, params):
    B, C, H, W = x.shape
    # TODO(synk): odd H/W (stride-2 "same" conv on odd sizes -> (H+1)//2 output)
    # not handled; requires bottom/right halo logic.
    assert H % 4 == 0 and W % 4 == 0, "H and W must be multiples of 4"
    Ho, Wo = H // 2, W // 2
    H4, W4 = Ho // 2, Wo // 2
    O1 = 4 * C
    E = params['conv2_w'].shape[0]

    x_nhwc = jnp.transpose(x, (0, 2, 3, 1))              # (B, H, W, C)

    # --- stage 1: conv_path (conv 3x3/s2 + BN + GELU) fused with the Haar DWT ---
    Wo_p = _round_up(Wo, 8)
    xpoly = _polyphase_pad(x_nhwc, Wo_p)                 # (B, 4, Ho+1, Wo_p+1, C)
    w1 = params['conv1_w'].transpose(2, 3, 1, 0).reshape(9 * C, O1)
    w1 = w1.astype(jnp.bfloat16)
    s1, t1 = _fold_bn(params['bn1_gamma'], params['bn1_beta'],
                      params['bn1_mean'], params['bn1_var'])
    xc_flat = _stage1_call(xpoly, w1, s1.reshape(1, O1), t1.reshape(1, O1))
    xc = xc_flat.reshape(B, Ho, Wo_p, 2 * O1)[:, :, :Wo, :]   # (B, Ho, Wo, 8C)

    # --- stage 2: grouped combine_conv (groups fused) + bias + folded BN ---
    W4_p = _round_up(W4, 8)
    xc_poly = _polyphase_pad(xc, W4_p)                   # (B, 4, H4+1, W4_p+1, 8C)
    w2 = _conv2_block_diag(params['conv2_w'], C).astype(jnp.bfloat16)
    s2, t2 = _fold_bn(params['bn2_gamma'], params['bn2_beta'],
                      params['bn2_mean'], params['bn2_var'])
    t2 = t2 + params['conv2_b'] * s2                     # fold conv bias into shift
    y2 = _stage2_call(xc_poly, w2, s2.reshape(1, E), t2.reshape(1, E))
    out = y2.reshape(B, H4, W4_p, E)[:, :, :W4, :]       # (B, H4, W4, E)
    return jnp.transpose(out, (0, 3, 1, 2))              # NCHW, single tiny transpose


# ----------------------- pure-JAX reference (for validation) -----------------------

def dw_embedded_reference(x, params):
    dn = ('NCHW', 'OIHW', 'NCHW')
    y = lax.conv_general_dilated(x, params['conv1_w'], (2, 2), ((1, 1), (1, 1)),
                                 dimension_numbers=dn)
    s1, t1 = _fold_bn(params['bn1_gamma'], params['bn1_beta'],
                      params['bn1_mean'], params['bn1_var'])
    x1 = _gelu_exact(y * s1[None, :, None, None] + t1[None, :, None, None])

    a = x[:, :, 0::2, 0::2]
    b = x[:, :, 0::2, 1::2]
    c = x[:, :, 1::2, 0::2]
    d = x[:, :, 1::2, 1::2]
    x2 = jnp.concatenate([0.5 * (a + b + c + d), 0.5 * (a + b - c - d),
                          0.5 * (a - b + c - d), 0.5 * (a - b - c + d)], axis=1)

    xc = jnp.concatenate([x1, x2], axis=1)
    y2 = lax.conv_general_dilated(xc, params['conv2_w'], (2, 2), ((1, 1), (1, 1)),
                                  dimension_numbers=dn, feature_group_count=2)
    y2 = y2 + params['conv2_b'][None, :, None, None]
    s2, t2 = _fold_bn(params['bn2_gamma'], params['bn2_beta'],
                      params['bn2_mean'], params['bn2_var'])
    return y2 * s2[None, :, None, None] + t2[None, :, None, None]


if __name__ == "__main__":
    B, C, H, W = 2, 4, 16, 16       # in_chans = 4
    embed_dim = 32                  # groups=2 grouped conv -> 16 out ch / group
    key = jax.random.PRNGKey(0)
    ks = jax.random.split(key, 12)
    params = {
        'conv1_w': 0.1 * jax.random.normal(ks[0], (4 * C, C, 3, 3), jnp.float32),
        'bn1_gamma': 1.0 + 0.1 * jax.random.normal(ks[1], (4 * C,), jnp.float32),
        'bn1_beta': 0.1 * jax.random.normal(ks[2], (4 * C,), jnp.float32),
        'bn1_mean': 0.1 * jax.random.normal(ks[3], (4 * C,), jnp.float32),
        'bn1_var': 0.5 + 0.5 * jax.random.uniform(ks[4], (4 * C,), jnp.float32),
        'conv2_w': 0.05 * jax.random.normal(ks[5], (embed_dim, 4 * C, 3, 3), jnp.float32),
        'conv2_b': 0.1 * jax.random.normal(ks[6], (embed_dim,), jnp.float32),
        'bn2_gamma': 1.0 + 0.1 * jax.random.normal(ks[7], (embed_dim,), jnp.float32),
        'bn2_beta': 0.1 * jax.random.normal(ks[8], (embed_dim,), jnp.float32),
        'bn2_mean': 0.1 * jax.random.normal(ks[9], (embed_dim,), jnp.float32),
        'bn2_var': 0.5 + 0.5 * jax.random.uniform(ks[10], (embed_dim,), jnp.float32),
    }
    x = jax.random.normal(ks[11], (B, C, H, W), jnp.float32)

    fwd = jax.jit(dw_embedded_forward)
    out = jax.block_until_ready(fwd(x, params))
    ref = jax.block_until_ready(dw_embedded_reference(x, params))

    assert out.shape == (B, embed_dim, H // 4, W // 4), out.shape
    # Tolerance sized for bf16 MXU inputs with f32 accumulation vs. an f32 reference.
    if not np.allclose(np.asarray(out), np.asarray(ref), rtol=2e-2, atol=2e-2):
        err = float(np.max(np.abs(np.asarray(out) - np.asarray(ref))))
        raise AssertionError(f"Pallas output does not match JAX reference (max|err|={err:.3e})")
    print("KERNEL_OK")
</pallas_src>

<mosaic_0001>
module attributes {stable_mosaic.version = 11 : i64} {
  func.func @_stage1_kernel(%arg0: i32, %arg1: memref<1x4x9x9x4xf32, #tpu.memory_space<vmem>>, %arg2: memref<36x16xbf16, #tpu.memory_space<vmem>>, %arg3: memref<1x16xf32, #tpu.memory_space<vmem>>, %arg4: memref<1x16xf32, #tpu.memory_space<vmem>>, %arg5: memref<1x64x32xf32, #tpu.memory_space<vmem>>) attributes {dimension_semantics = [#tpu.dimension_semantics<parallel>], iteration_bounds = array<i64: 2>, scalar_prefetch = 0 : i64, scratch_operands = 0 : i64, tpu.core_type = #tpu.core_type<tc>, window_params = [{transform_indices = @transform_0, window_bounds = array<i64: 1, 4, 9, 9, 4>}, {pipeline_mode = #tpu.pipeline_mode<synchronous>, transform_indices = @transform_1, window_bounds = array<i64: 36, 16>}, {pipeline_mode = #tpu.pipeline_mode<synchronous>, transform_indices = @transform_2, window_bounds = array<i64: 1, 16>}, {pipeline_mode = #tpu.pipeline_mode<synchronous>, transform_indices = @transform_3, window_bounds = array<i64: 1, 16>}, {transform_indices = @transform_4, window_bounds = array<i64: 1, 64, 32>}]} {
    %c0 = arith.constant 0 : index
    %c0_0 = arith.constant 0 : index
    %c0_1 = arith.constant 0 : index
    %c0_2 = arith.constant 0 : index
    %c0_3 = arith.constant 0 : index
    %0 = vector.load %arg1[%c0, %c0_0, %c0_1, %c0_2, %c0_3] : memref<1x4x9x9x4xf32, #tpu.memory_space<vmem>>, vector<1x4x9x9x4xf32>
    %1 = vector.shape_cast %0 : vector<1x4x9x9x4xf32> to vector<4x9x9x4xf32>
    %2 = vector.extract_strided_slice %1 {offsets = [3, 0, 0, 0], sizes = [1, 8, 8, 4], strides = [1, 1, 1, 1]} : vector<4x9x9x4xf32> to vector<1x8x8x4xf32>
    %3 = vector.shape_cast %2 : vector<1x8x8x4xf32> to vector<8x8x4xf32>
    %4 = vector.extract_strided_slice %1 {offsets = [2, 0, 1, 0], sizes = [1, 8, 8, 4], strides = [1, 1, 1, 1]} : vector<4x9x9x4xf32> to vector<1x8x8x4xf32>
    %5 = vector.shape_cast %4 : vector<1x8x8x4xf32> to vector<8x8x4xf32>
    %6 = vector.extract_strided_slice %1 {offsets = [3, 0, 1, 0], sizes = [1, 8, 8, 4], strides = [1, 1, 1, 1]} : vector<4x9x9x4xf32> to vector<1x8x8x4xf32>
    %7 = vector.shape_cast %6 : vector<1x8x8x4xf32> to vector<8x8x4xf32>
    %8 = vector.extract_strided_slice %1 {offsets = [1, 1, 0, 0], sizes = [1, 8, 8, 4], strides = [1, 1, 1, 1]} : vector<4x9x9x4xf32> to vector<1x8x8x4xf32>
    %9 = vector.shape_cast %8 : vector<1x8x8x4xf32> to vector<8x8x4xf32>
    %10 = vector.extract_strided_slice %1 {offsets = [0, 1, 1, 0], sizes = [1, 8, 8, 4], strides = [1, 1, 1, 1]} : vector<4x9x9x4xf32> to vector<1x8x8x4xf32>
    %11 = vector.shape_cast %10 : vector<1x8x8x4xf32> to vector<8x8x4xf32>
    %12 = vector.extract_strided_slice %1 {offsets = [1, 1, 1, 0], sizes = [1, 8, 8, 4], strides = [1, 1, 1, 1]} : vector<4x9x9x4xf32> to vector<1x8x8x4xf32>
    %13 = vector.shape_cast %12 : vector<1x8x8x4xf32> to vector<8x8x4xf32>
    %14 = vector.extract_strided_slice %1 {offsets = [3, 1, 0, 0], sizes = [1, 8, 8, 4], strides = [1, 1, 1, 1]} : vector<4x9x9x4xf32> to vector<1x8x8x4xf32>
    %15 = vector.shape_cast %14 : vector<1x8x8x4xf32> to vector<8x8x4xf32>
    %16 = vector.extract_strided_slice %1 {offsets = [2, 1, 1, 0], sizes = [1, 8, 8, 4], strides = [1, 1, 1, 1]} : vector<4x9x9x4xf32> to vector<1x8x8x4xf32>
    %17 = vector.shape_cast %16 : vector<1x8x8x4xf32> to vector<8x8x4xf32>
    %18 = vector.extract_strided_slice %1 {offsets = [3, 1, 1, 0], sizes = [1, 8, 8, 4], strides = [1, 1, 1, 1]} : vector<4x9x9x4xf32> to vector<1x8x8x4xf32>
    %19 = vector.shape_cast %18 : vector<1x8x8x4xf32> to vector<8x8x4xf32>
    %20 = tpu.concatenate %3, %5, %7, %9, %11, %13, %15, %17, %19 in 2 : vector<8x8x4xf32>, vector<8x8x4xf32>, vector<8x8x4xf32>, vector<8x8x4xf32>, vector<8x8x4xf32>, vector<8x8x4xf32>, vector<8x8x4xf32>, vector<8x8x4xf32>, vector<8x8x4xf32> -> vector<8x8x36xf32>
    %21 = vector.shape_cast %20 : vector<8x8x36xf32> to vector<64x36xf32>
    %22 = arith.truncf %21 : vector<64x36xf32> to vector<64x36xbf16>
    %c0_4 = arith.constant 0 : index
    %c0_5 = arith.constant 0 : index
    %23 = vector.load %arg2[%c0_4, %c0_5] : memref<36x16xbf16, #tpu.memory_space<vmem>>, vector<36x16xbf16>
    %cst = arith.constant dense<0.000000e+00> : vector<64x16xf32>
    %24 = tpu.matmul %22, %23, %cst {dimension_numbers = #tpu.dot_dimension_numbers<[1], [0], [0], [1], [0, 0, 1, 1], [], []>} : vector<64x36xbf16>, vector<36x16xbf16>, vector<64x16xf32> -> vector<64x16xf32>
    %c0_6 = arith.constant 0 : index
    %c0_7 = arith.constant 0 : index
    %25 = vector.load %arg3[%c0_6, %c0_7] : memref<1x16xf32, #tpu.memory_space<vmem>>, vector<1x16xf32>
    %26 = vector.broadcast %25 : vector<1x16xf32> to vector<64x16xf32>
    %27 = arith.mulf %24, %26 : vector<64x16xf32>
    %c0_8 = arith.constant 0 : index
    %c0_9 = arith.constant 0 : index
    %28 = vector.load %arg4[%c0_8, %c0_9] : memref<1x16xf32, #tpu.memory_space<vmem>>, vector<1x16xf32>
    %29 = vector.broadcast %28 : vector<1x16xf32> to vector<64x16xf32>
    %30 = arith.addf %27, %29 : vector<64x16xf32>
    %cst_10 = arith.constant 5.000000e-01 : f32
    %31 = vector.broadcast %cst_10 : f32 to vector<64x16xf32>
    %32 = arith.mulf %31, %30 : vector<64x16xf32>
    %cst_11 = arith.constant 1.41421354 : f32
    %33 = vector.broadcast %cst_11 : f32 to vector<64x16xf32>
    %34 = arith.divf %30, %33 : vector<64x16xf32>
    %35 = math.erf %34 : vector<64x16xf32>
    %cst_12 = arith.constant 1.000000e+00 : f32
    %36 = vector.broadcast %cst_12 : f32 to vector<64x16xf32>
    %37 = arith.addf %36, %35 : vector<64x16xf32>
    %38 = arith.mulf %32, %37 : vector<64x16xf32>
    %39 = vector.extract_strided_slice %1 {offsets = [0, 1, 1, 0], sizes = [1, 8, 8, 4], strides = [1, 1, 1, 1]} : vector<4x9x9x4xf32> to vector<1x8x8x4xf32>
    %40 = vector.shape_cast %39 : vector<1x8x8x4xf32> to vector<8x8x4xf32>
    %41 = vector.shape_cast %40 : vector<8x8x4xf32> to vector<64x4xf32>
    %42 = vector.extract_strided_slice %1 {offsets = [1, 1, 1, 0], sizes = [1, 8, 8, 4], strides = [1, 1, 1, 1]} : vector<4x9x9x4xf32> to vector<1x8x8x4xf32>
    %43 = vector.shape_cast %42 : vector<1x8x8x4xf32> to vector<8x8x4xf32>
    %44 = vector.shape_cast %43 : vector<8x8x4xf32> to vector<64x4xf32>
    %45 = vector.extract_strided_slice %1 {offsets = [2, 1, 1, 0], sizes = [1, 8, 8, 4], strides = [1, 1, 1, 1]} : vector<4x9x9x4xf32> to vector<1x8x8x4xf32>
    %46 = vector.shape_cast %45 : vector<1x8x8x4xf32> to vector<8x8x4xf32>
    %47 = vector.shape_cast %46 : vector<8x8x4xf32> to vector<64x4xf32>
    %48 = vector.extract_strided_slice %1 {offsets = [3, 1, 1, 0], sizes = [1, 8, 8, 4], strides = [1, 1, 1, 1]} : vector<4x9x9x4xf32> to vector<1x8x8x4xf32>
    %49 = vector.shape_cast %48 : vector<1x8x8x4xf32> to vector<8x8x4xf32>
    %50 = vector.shape_cast %49 : vector<8x8x4xf32> to vector<64x4xf32>
    %51 = arith.addf %41, %44 : vector<64x4xf32>
    %52 = arith.addf %51, %47 : vector<64x4xf32>
    %53 = arith.addf %52, %50 : vector<64x4xf32>
    %cst_13 = arith.constant 5.000000e-01 : f32
    %54 = vector.broadcast %cst_13 : f32 to vector<64x4xf32>
    %55 = arith.mulf %54, %53 : vector<64x4xf32>
    %56 = arith.addf %41, %44 : vector<64x4xf32>
    %57 = arith.subf %56, %47 : vector<64x4xf32>
    %58 = arith.subf %57, %50 : vector<64x4xf32>
    %cst_14 = arith.constant 5.000000e-01 : f32
    %59 = vector.broadcast %cst_14 : f32 to vector<64x4xf32>
    %60 = arith.mulf %59, %58 : vector<64x4xf32>
    %61 = arith.subf %41, %44 : vector<64x4xf32>
    %62 = arith.addf %61, %47 : vector<64x4xf32>
    %63 = arith.subf %62, %50 : vector<64x4xf32>
    %cst_15 = arith.constant 5.000000e-01 : f32
    %64 = vector.broadcast %cst_15 : f32 to vector<64x4xf32>
    %65 = arith.mulf %64, %63 : vector<64x4xf32>
    %66 = arith.subf %41, %44 : vector<64x4xf32>
    %67 = arith.subf %66, %47 : vector<64x4xf32>
    %68 = arith.addf %67, %50 : vector<64x4xf32>
    %cst_16 = arith.constant 5.000000e-01 : f32
    %69 = vector.broadcast %cst_16 : f32 to vector<64x4xf32>
    %70 = arith.mulf %69, %68 : vector<64x4xf32>
    %71 = tpu.concatenate %38, %55, %60, %65, %70 in 1 : vector<64x16xf32>, vector<64x4xf32>, vector<64x4xf32>, vector<64x4xf32>, vector<64x4xf32> -> vector<64x32xf32>
    %c0_17 = arith.constant 0 : index
    %c0_18 = arith.constant 0 : index
    %c0_19 = arith.constant 0 : index
    %72 = vector.load %arg5[%c0_17, %c0_18, %c0_19] : memref<1x64x32xf32, #tpu.memory_space<vmem>>, vector<1x64x32xf32>
    %73 = vector.shape_cast %72 : vector<1x64x32xf32> to vector<64x32xf32>
    %74 = vector.shape_cast %71 : vector<64x32xf32> to vector<1x64x32xf32>
    tpu.vector_store %arg5[%c0_17, %c0_18, %c0_19], %74 {strides = array<i32>} : memref<1x64x32xf32, #tpu.memory_space<vmem>>, vector<1x64x32xf32>,
    return
  }
  func.func @transform_0(%arg0: i32) -> (i32, i32, i32, i32, i32) {
    %c0_i32 = arith.constant 0 : i32
    %c0_i32_0 = arith.constant 0 : i32
    %c0_i32_1 = arith.constant 0 : i32
    %c0_i32_2 = arith.constant 0 : i32
    %c0_i32_3 = arith.constant 0 : i32
    return %arg0, %c0_i32, %c0_i32_0, %c0_i32_1, %c0_i32_2 : i32, i32, i32, i32, i32
  }
  func.func @transform_1(%arg0: i32) -> (i32, i32) {
    %c0_i32 = arith.constant 0 : i32
    %c0_i32_0 = arith.constant 0 : i32
    %c0_i32_1 = arith.constant 0 : i32
    return %c0_i32, %c0_i32_0 : i32, i32
  }
  func.func @transform_2(%arg0: i32) -> (i32, i32) {
    %c0_i32 = arith.constant 0 : i32
    %c0_i32_0 = arith.constant 0 : i32
    %c0_i32_1 = arith.constant 0 : i32
    return %c0_i32, %c0_i32_0 : i32, i32
  }
  func.func @transform_3(%arg0: i32) -> (i32, i32) {
    %c0_i32 = arith.constant 0 : i32
    %c0_i32_0 = arith.constant 0 : i32
    %c0_i32_1 = arith.constant 0 : i32
    return %c0_i32, %c0_i32_0 : i32, i32
  }
  func.func @transform_4(%arg0: i32) -> (i32, i32, i32) {
    %c0_i32 = arith.constant 0 : i32
    %c0_i32_0 = arith.constant 0 : i32
    %c0_i32_1 = arith.constant 0 : i32
    return %arg0, %c0_i32, %c0_i32_0 : i32, i32, i32
  }
}

module attributes {stable_mosaic.version = 11 : i64} {
  func.func @_stage2_kernel(%arg0: i32, %arg1: memref<1x4x5x9x32xf32, #tpu.memory_space<vmem>>, %arg2: memref<288x32xbf16, #tpu.memory_space<vmem>>, %arg3: memref<1x32xf32, #tpu.memory_space<vmem>>, %arg4: memref<1x32xf32, #tpu.memory_space<vmem>>, %arg5: memref<1x32x32xf32, #tpu.memory_space<vmem>>) attributes {dimension_semantics = [#tpu.dimension_semantics<parallel>], iteration_bounds = array<i64: 2>, scalar_prefetch = 0 : i64, scratch_operands = 0 : i64, tpu.core_type = #tpu.core_type<tc>, window_params = [{transform_indices = @transform_0, window_bounds = array<i64: 1, 4, 5, 9, 32>}, {pipeline_mode = #tpu.pipeline_mode<synchronous>, transform_indices = @transform_1, window_bounds = array<i64: 288, 32>}, {pipeline_mode = #tpu.pipeline_mode<synchronous>, transform_indices = @transform_2, window_bounds = array<i64: 1, 32>}, {pipeline_mode = #tpu.pipeline_mode<synchronous>, transform_indices = @transform_3, window_bounds = array<i64: 1, 32>}, {transform_indices = @transform_4, window_bounds = array<i64: 1, 32, 32>}]} {
    %c0 = arith.constant 0 : index
    %c0_0 = arith.constant 0 : index
    %c0_1 = arith.constant 0 : index
    %c0_2 = arith.constant 0 : index
    %c0_3 = arith.constant 0 : index
    %0 = vector.load %arg1[%c0, %c0_0, %c0_1, %c0_2, %c0_3] : memref<1x4x5x9x32xf32, #tpu.memory_space<vmem>>, vector<1x4x5x9x32xf32>
    %1 = vector.shape_cast %0 : vector<1x4x5x9x32xf32> to vector<4x5x9x32xf32>
    %2 = vector.extract_strided_slice %1 {offsets = [3, 0, 0, 0], sizes = [1, 4, 8, 32], strides = [1, 1, 1, 1]} : vector<4x5x9x32xf32> to vector<1x4x8x32xf32>
    %3 = vector.shape_cast %2 : vector<1x4x8x32xf32> to vector<4x8x32xf32>
    %4 = vector.extract_strided_slice %1 {offsets = [2, 0, 1, 0], sizes = [1, 4, 8, 32], strides = [1, 1, 1, 1]} : vector<4x5x9x32xf32> to vector<1x4x8x32xf32>
    %5 = vector.shape_cast %4 : vector<1x4x8x32xf32> to vector<4x8x32xf32>
    %6 = vector.extract_strided_slice %1 {offsets = [3, 0, 1, 0], sizes = [1, 4, 8, 32], strides = [1, 1, 1, 1]} : vector<4x5x9x32xf32> to vector<1x4x8x32xf32>
    %7 = vector.shape_cast %6 : vector<1x4x8x32xf32> to vector<4x8x32xf32>
    %8 = vector.extract_strided_slice %1 {offsets = [1, 1, 0, 0], sizes = [1, 4, 8, 32], strides = [1, 1, 1, 1]} : vector<4x5x9x32xf32> to vector<1x4x8x32xf32>
    %9 = vector.shape_cast %8 : vector<1x4x8x32xf32> to vector<4x8x32xf32>
    %10 = vector.extract_strided_slice %1 {offsets = [0, 1, 1, 0], sizes = [1, 4, 8, 32], strides = [1, 1, 1, 1]} : vector<4x5x9x32xf32> to vector<1x4x8x32xf32>
    %11 = vector.shape_cast %10 : vector<1x4x8x32xf32> to vector<4x8x32xf32>
    %12 = vector.extract_strided_slice %1 {offsets = [1, 1, 1, 0], sizes = [1, 4, 8, 32], strides = [1, 1, 1, 1]} : vector<4x5x9x32xf32> to vector<1x4x8x32xf32>
    %13 = vector.shape_cast %12 : vector<1x4x8x32xf32> to vector<4x8x32xf32>
    %14 = vector.extract_strided_slice %1 {offsets = [3, 1, 0, 0], sizes = [1, 4, 8, 32], strides = [1, 1, 1, 1]} : vector<4x5x9x32xf32> to vector<1x4x8x32xf32>
    %15 = vector.shape_cast %14 : vector<1x4x8x32xf32> to vector<4x8x32xf32>
    %16 = vector.extract_strided_slice %1 {offsets = [2, 1, 1, 0], sizes = [1, 4, 8, 32], strides = [1, 1, 1, 1]} : vector<4x5x9x32xf32> to vector<1x4x8x32xf32>
    %17 = vector.shape_cast %16 : vector<1x4x8x32xf32> to vector<4x8x32xf32>
    %18 = vector.extract_strided_slice %1 {offsets = [3, 1, 1, 0], sizes = [1, 4, 8, 32], strides = [1, 1, 1, 1]} : vector<4x5x9x32xf32> to vector<1x4x8x32xf32>
    %19 = vector.shape_cast %18 : vector<1x4x8x32xf32> to vector<4x8x32xf32>
    %20 = tpu.concatenate %3, %5, %7, %9, %11, %13, %15, %17, %19 in 2 : vector<4x8x32xf32>, vector<4x8x32xf32>, vector<4x8x32xf32>, vector<4x8x32xf32>, vector<4x8x32xf32>, vector<4x8x32xf32>, vector<4x8x32xf32>, vector<4x8x32xf32>, vector<4x8x32xf32> -> vector<4x8x288xf32>
    %21 = vector.shape_cast %20 : vector<4x8x288xf32> to vector<32x288xf32>
    %22 = arith.truncf %21 : vector<32x288xf32> to vector<32x288xbf16>
    %c0_4 = arith.constant 0 : index
    %c0_5 = arith.constant 0 : index
    %23 = vector.load %arg2[%c0_4, %c0_5] : memref<288x32xbf16, #tpu.memory_space<vmem>>, vector<288x32xbf16>
    %cst = arith.constant dense<0.000000e+00> : vector<32x32xf32>
    %24 = tpu.matmul %22, %23, %cst {dimension_numbers = #tpu.dot_dimension_numbers<[1], [0], [0], [1], [0, 0, 1, 1], [], []>} : vector<32x288xbf16>, vector<288x32xbf16>, vector<32x32xf32> -> vector<32x32xf32>
    %c0_6 = arith.constant 0 : index
    %c0_7 = arith.constant 0 : index
    %25 = vector.load %arg3[%c0_6, %c0_7] : memref<1x32xf32, #tpu.memory_space<vmem>>, vector<1x32xf32>
    %26 = vector.broadcast %25 : vector<1x32xf32> to vector<32x32xf32>
    %27 = arith.mulf %24, %26 : vector<32x32xf32>
    %c0_8 = arith.constant 0 : index
    %c0_9 = arith.constant 0 : index
    %28 = vector.load %arg4[%c0_8, %c0_9] : memref<1x32xf32, #tpu.memory_space<vmem>>, vector<1x32xf32>
    %29 = vector.broadcast %28 : vector<1x32xf32> to vector<32x32xf32>
    %30 = arith.addf %27, %29 : vector<32x32xf32>
    %c0_10 = arith.constant 0 : index
    %c0_11 = arith.constant 0 : index
    %c0_12 = arith.constant 0 : index
    %31 = vector.load %arg5[%c0_10, %c0_11, %c0_12] : memref<1x32x32xf32, #tpu.memory_space<vmem>>, vector<1x32x32xf32>
    %32 = vector.shape_cast %31 : vector<1x32x32xf32> to vector<32x32xf32>
    %33 = vector.shape_cast %30 : vector<32x32xf32> to vector<1x32x32xf32>
    tpu.vector_store %arg5[%c0_10, %c0_11, %c0_12], %33 {strides = array<i32>} : memref<1x32x32xf32, #tpu.memory_space<vmem>>, vector<1x32x32xf32>,
    return
  }
  func.func @transform_0(%arg0: i32) -> (i32, i32, i32, i32, i32) {
    %c0_i32 = arith.constant 0 : i32
    %c0_i32_0 = arith.constant 0 : i32
    %c0_i32_1 = arith.constant 0 : i32
    %c0_i32_2 = arith.constant 0 : i32
    %c0_i32_3 = arith.constant 0 : i32
    return %arg0, %c0_i32, %c0_i32_0, %c0_i32_1, %c0_i32_2 : i32, i32, i32, i32, i32
  }
  func.func @transform_1(%arg0: i32) -> (i32, i32) {
    %c0_i32 = arith.constant 0 : i32
    %c0_i32_0 = arith.constant 0 : i32
    %c0_i32_1 = arith.constant 0 : i32
    return %c0_i32, %c0_i32_0 : i32, i32
  }
  func.func @transform_2(%arg0: i32) -> (i32, i32) {
    %c0_i32 = arith.constant 0 : i32
    %c0_i32_0 = arith.constant 0 : i32
    %c0_i32_1 = arith.constant 0 : i32
    return %c0_i32, %c0_i32_0 : i32, i32
  }
  func.func @transform_3(%arg0: i32) -> (i32, i32) {
    %c0_i32 = arith.constant 0 : i32
    %c0_i32_0 = arith.constant 0 : i32
    %c0_i32_1 = arith.constant 0 : i32
    return %c0_i32, %c0_i32_0 : i32, i32
  }
  func.func @transform_4(%arg0: i32) -> (i32, i32, i32) {
    %c0_i32 = arith.constant 0 : i32
    %c0_i32_0 = arith.constant 0 : i32
    %c0_i32_1 = arith.constant 0 : i32
    return %arg0, %c0_i32, %c0_i32_0 : i32, i32, i32
  }
}

</mosaic_0001>

<llo_original>
// kernel: dw_embedded_forward.2
$region0: #{dw_embedded_forward.2}
  #allocation0 [shape = 'u32[]', space=smem, size = 0x4, offset = 0x4, fixed_abs, tag = 'smem constant byte address 0x4 - core index']
  #allocation1 [shape = 'u32[144,128]{1,0:T(1,128)}', space=vmem, size = 0x12000, scoped, tag = 'internal scratch']
  %s0 = inlined_call_operand.vmem [shape: f32[2,4,9,9,4], index: 0, kind: input, shape index: {}]
  %s1 = inlined_call_operand.vmem [shape: bf16[36,16], index: 1, kind: input, shape index: {}]
  %s2 = inlined_call_operand.vmem [shape: f32[1,16], index: 2, kind: input, shape index: {}]
  %s3 = inlined_call_operand.vmem [shape: f32[1,16], index: 3, kind: input, shape index: {}]
  %s4 = inlined_call_operand.vmem [shape: f32[2,64,32], index: 4, kind: output, shape index: {}]
  %s5 = sld [smem:[#allocation0]]
  $region49: #{dw_embedded_forward.2} parent=0
    _
  %s7 = ssub.s32 1, %s5
  %s8 = scalar_select 0, %s7, %s5
  loop: start=0, step=1, limit=4
  $region2: #{dw_embedded_forward.2} parent=0 // loop_pre_header
    _
  $region3: #{dw_embedded_forward.2} parent=0 // loop_header
    %s10 = sphi 0, %s14
    %p11 = scmp.ge.s32.totalorder %s10, 4
    %s20 = sphi 0, %s22
    %s23 = sphi 0, %s20
    %s24 = sphi 0, %s23
    %s40 = sphi 0, %s24
    %s44 = sphi 0, %s44
    %s46 = sphi 0, %s44
    %s47 = sphi 0, %s46
    %s61 = sphi 0, %s47
    %s65 = sphi 0, %s65
    %s67 = sphi 0, %s65
    %s68 = sphi 0, %s67
    %s82 = sphi 0, %s68
    %s86 = sphi 0, %s86
    %s88 = sphi 0, %s86
    %s89 = sphi 0, %s88
    %s103 = sphi 0, %s89
    %s109 = sphi 0, %s111
    %s112 = sphi 0, %s109
    %s113 = sphi 0, %s112
    %s129 = sphi 0, %s113
  $region4: #{dw_embedded_forward.2} parent=0 // loop_header_branch
    %13 = sbr.rel (%p11) target = $region8
  $region5: #{dw_embedded_forward.2} parent=0 // loop_body
    %s15 = ssub.s32 %s10, 1
    %s16 = ssub.s32 %s10, 2
    %s17 = sadd.s32 %s10, 1
    %s18 = ssub.s32 %s10, %s17
    %p19 = scmp.eq.s32.totalorder %s18, 0
    %s21 = sadd.s32 %s20, 1
    %s22 = scalar_select %p19, %s20, %s21
    %p25 = pneg %p19
    %p26 = scmp.eq.s32.totalorder %s10, 1
    %p27 = por %p25, %p26
    %p28 = scmp.ne.s32.totalorder %s20, %s23
    %p29 = scmp.eq.s32.totalorder %s10, 0
    %p30 = por %p28, %p29
    %p31 = scmp.ne.s32.totalorder %s20, %s23
    %p32 = scmp.eq.s32.totalorder %s15, 1
    %p33 = por %p31, %p32
    %p34 = scmp.ne.s32.totalorder %s23, %s24
    %p35 = scmp.eq.s32.totalorder %s15, 0
    %p36 = por %p34, %p35
    %p37 = scmp.ne.s32.totalorder %s23, %s24
    %p38 = scmp.eq.s32.totalorder %s16, 1
    %p39 = por %p37, %p38
    %p41 = scmp.ne.s32.totalorder %s24, %s40
    %p42 = scmp.eq.s32.totalorder %s16, 0
    %p43 = por %p41, %p42
    %s45 = sadd.s32 %s44, 1
    %p48 = scmp.eq.s32.totalorder %s10, 1
    %p49 = scmp.ne.s32.totalorder %s44, %s46
    %p50 = scmp.eq.s32.totalorder %s10, 0
    %p51 = por %p49, %p50
    %p52 = scmp.ne.s32.totalorder %s44, %s46
    %p53 = scmp.eq.s32.totalorder %s15, 1
    %p54 = por %p52, %p53
    %p55 = scmp.ne.s32.totalorder %s46, %s47
    %p56 = scmp.eq.s32.totalorder %s15, 0
    %p57 = por %p55, %p56
    %p58 = scmp.ne.s32.totalorder %s46, %s47
    %p59 = scmp.eq.s32.totalorder %s16, 1
    %p60 = por %p58, %p59
    %p62 = scmp.ne.s32.totalorder %s47, %s61
    %p63 = scmp.eq.s32.totalorder %s16, 0
    %p64 = por %p62, %p63
    %s66 = sadd.s32 %s65, 1
    %p69 = scmp.eq.s32.totalorder %s10, 1
    %p70 = scmp.ne.s32.totalorder %s65, %s67
    %p71 = scmp.eq.s32.totalorder %s10, 0
    %p72 = por %p70, %p71
    %p73 = scmp.ne.s32.totalorder %s65, %s67
    %p74 = scmp.eq.s32.totalorder %s15, 1
    %p75 = por %p73, %p74
    %p76 = scmp.ne.s32.totalorder %s67, %s68
    %p77 = scmp.eq.s32.totalorder %s15, 0
    %p78 = por %p76, %p77
    %p79 = scmp.ne.s32.totalorder %s67, %s68
    %p80 = scmp.eq.s32.totalorder %s16, 1
    %p81 = por %p79, %p80
    %p83 = scmp.ne.s32.totalorder %s68, %s82
    %p84 = scmp.eq.s32.totalorder %s16, 0
    %p85 = por %p83, %p84
    %s87 = sadd.s32 %s86, 1
    %p90 = scmp.eq.s32.totalorder %s10, 1
    %p91 = scmp.ne.s32.totalorder %s86, %s88
    %p92 = scmp.eq.s32.totalorder %s10, 0
    %p93 = por %p91, %p92
    %p94 = scmp.ne.s32.totalorder %s86, %s88
    %p95 = scmp.eq.s32.totalorder %s15, 1
    %p96 = por %p94, %p95
    %p97 = scmp.ne.s32.totalorder %s88, %s89
    %p98 = scmp.eq.s32.totalorder %s15, 0
    %p99 = por %p97, %p98
    %p100 = scmp.ne.s32.totalorder %s88, %s89
    %p101 = scmp.eq.s32.totalorder %s16, 1
    %p102 = por %p100, %p101
    %p104 = scmp.ne.s32.totalorder %s89, %s103
    %p105 = scmp.eq.s32.totalorder %s16, 0
    %p106 = por %p104, %p105
    %s107 = ssub.s32 %s10, %s17
    %p108 = scmp.eq.s32.totalorder %s107, 0
    %s110 = sadd.s32 %s109, 1
    %s111 = scalar_select %p108, %s109, %s110
    %p114 = pneg %p108
    %p115 = scmp.eq.s32.totalorder %s10, 1
    %p116 = por %p114, %p115
    %p117 = scmp.ne.s32.totalorder %s109, %s112
    %p118 = scmp.eq.s32.totalorder %s10, 0
    %p119 = por %p117, %p118
    %p120 = scmp.ne.s32.totalorder %s109, %s112
    %p121 = scmp.eq.s32.totalorder %s15, 1
    %p122 = por %p120, %p121
    %p123 = scmp.ne.s32.totalorder %s112, %s113
    %p124 = scmp.eq.s32.totalorder %s15, 0
    %p125 = por %p123, %p124
    %p126 = scmp.ne.s32.totalorder %s112, %s113
    %p127 = scmp.eq.s32.totalorder %s16, 1
    %p128 = por %p126, %p127
    %p130 = scmp.ne.s32.totalorder %s113, %s129
    %p131 = scmp.eq.s32.totalorder %s16, 0
    %p132 = por %p130, %p131
    %p133 = scmp.le.s32.totalorder 1, %s10
    %p134 = scmp.lt.s32.totalorder %s10, 3
    %p135 = pnand %p133, %p134
    %p136 = pneg %p135
    // Predicated region
    $region9: #{dw_embedded_forward.2} parent=5 // pred_check
      _
    $region10: #{dw_embedded_forward.2} parent=5 // pred_check_branch
      %138 = sbr.rel (%p135) target = $region12
    $region11: #{dw_embedded_forward.2} parent=5 // pred_region
      %s139 = ssub.s32 %s10, 1
      // Predicated region
      $region13: #{dw_embedded_forward.2} parent=11 // pred_check
        %p140 = pneg %p57
      $region14: #{dw_embedded_forward.2} parent=11 // pred_check_branch
        %142 = sbr.rel (%p140) target = $region16
      $region15: #{dw_embedded_forward.2} parent=11 // pred_region
        _
      $region16: #{dw_embedded_forward.2} parent=11 // pred_fallthru
        _
      // Predicated region
      $region17: #{dw_embedded_forward.2} parent=11 // pred_check
        %p143 = pneg %p78
      $region18: #{dw_embedded_forward.2} parent=11 // pred_check_branch
        %145 = sbr.rel (%p143) target = $region20
      $region19: #{dw_embedded_forward.2} parent=11 // pred_region
        _
      $region20: #{dw_embedded_forward.2} parent=11 // pred_fallthru
        _
      // Predicated region
      $region21: #{dw_embedded_forward.2} parent=11 // pred_check
        %p146 = pneg %p99
      $region22: #{dw_embedded_forward.2} parent=11 // pred_check_branch
        %148 = sbr.rel (%p146) target = $region24
      $region23: #{dw_embedded_forward.2} parent=11 // pred_region
        _
      $region24: #{dw_embedded_forward.2} parent=11 // pred_fallthru
        _
    $region12: #{dw_embedded_forward.2} parent=5 // pred_fallthru
      _
    %p149 = scmp.lt.s32.totalorder %s10, 2
    // Predicated region
    $region25: #{dw_embedded_forward.2} parent=5 // pred_check
      %p150 = pneg %p149
    $region26: #{dw_embedded_forward.2} parent=5 // pred_check_branch
      %152 = sbr.rel (%p150) target = $region28
    $region27: #{dw_embedded_forward.2} parent=5 // pred_region
      // Predicated region
      $region29: #{dw_embedded_forward.2} parent=27 // pred_check
        %p153 = pneg %p30
      $region30: #{dw_embedded_forward.2} parent=27 // pred_check_branch
        %155 = sbr.rel (%p153) target = $region32
      $region31: #{dw_embedded_forward.2} parent=27 // pred_region
        %p156 = scmp.lt.s32.totalorder %s10, 1
        %s157 = scalar_select %p156, %s10, 1
        %s158 = smul.addr %s157, 72
        %s159 = smul.addr %s158, 8
        %s160 = scalar_lea.vmem %s0, %s159
      $region32: #{dw_embedded_forward.2} parent=27 // pred_fallthru
        _
    $region28: #{dw_embedded_forward.2} parent=5 // pred_fallthru
      _
    %p161 = scmp.le.s32.totalorder 1, %s10
    %p162 = scmp.lt.s32.totalorder %s10, 3
    %p163 = pnand %p161, %p162
    %p164 = pneg %p163
    // Predicated region
    $region33: #{dw_embedded_forward.2} parent=5 // pred_check
      _
    $region34: #{dw_embedded_forward.2} parent=5 // pred_check_branch
      %166 = sbr.rel (%p163) target = $region36
    $region35: #{dw_embedded_forward.2} parent=5 // pred_region
      %s167 = ssub.s32 %s10, 1
      %p168 = scmp.lt.s32.totalorder %s15, 1
      %s169 = scalar_select %p168, %s15, 1
      %s170 = smul.addr %s169, 72
      %s171 = smul.addr %s170, 8
      %s172 = scalar_lea.vmem %s0, %s171
      %p173 = pneg %p36
      %p174 = pneg %p33
      %p175 = pneg %p57
      %p176 = pneg %p54
      %p177 = pneg %p78
      %p178 = pneg %p75
      %p179 = pneg %p99
      %p180 = pneg %p96
      %p181 = pneg %p125
      %p182 = pneg %p122
      %p183 = scmp.lt.s32.totalorder %s15, 1
      %s184 = scalar_select %p183, %s15, 1
      %s185 = smul.addr %s184, 8
      %s186 = smul.addr %s185, 8
      %s187 = scalar_lea.vmem %s4, %s186
      %p188 = scmp.lt.s32.totalorder %s15, 1
      %s189 = scalar_select %p188, %s15, 1
      %s190 = smul.addr %s189, 72
      %s191 = smul.addr %s190, 8
      %s192 = scalar_lea.vmem %s0, %s191
      %p193 = scmp.lt.s32.totalorder %s15, 1
      %s194 = scalar_select %p193, %s15, 1
      %s195 = smul.addr %s194, 8
      %s196 = smul.addr %s195, 8
      %s197 = scalar_lea.vmem %s4, %s196
      %v199 = vld [vmem:[%s192 + $0x10] sm:$0xff]
      %v200 = vld [vmem:[%s192 + $0x18] sm:$0x1]
      %v201 = vld [vmem:[%s192 + $0x20] sm:$0xff]
      %v202 = vld [vmem:[%s192 + $0x28] sm:$0x1]
      %v203 = vld [vmem:[%s192 + $0x30] sm:$0xff]
      %v204 = vld [vmem:[%s192 + $0x38] sm:$0x1]
      %v205 = vld [vmem:[%s192 + $0x40] sm:$0xff]
      %v206 = vld [vmem:[%s192 + $0x48] sm:$0x1]
      %v207 = vld [vmem:[%s192 + $0x50] sm:$0xff]
      %v208 = vld [vmem:[%s192 + $0x58] sm:$0x1]
      %v209 = vld [vmem:[%s192 + $0x60] sm:$0xff]
      %v210 = vld [vmem:[%s192 + $0x68] sm:$0x1]
      %v211 = vld [vmem:[%s192 + $0x70] sm:$0xff]
      %v212 = vld [vmem:[%s192 + $0x78] sm:$0x1]
      %v213 = vld [vmem:[%s192 + $0x80] sm:$0xff]
      %v214 = vld [vmem:[%s192 + $0x88] sm:$0x1]
      %v215 = vld [vmem:[%s192 + $0xa0] sm:$0xff]
      %v216 = vld [vmem:[%s192 + $0xa8] sm:$0x1]
      %v217 = vld [vmem:[%s192 + $0xb0] sm:$0xff]
      %v218 = vld [vmem:[%s192 + $0xb8] sm:$0x1]
      %v219 = vld [vmem:[%s192 + $0xc0] sm:$0xff]
      %v220 = vld [vmem:[%s192 + $0xc8] sm:$0x1]
      %v221 = vld [vmem:[%s192 + $0xd0] sm:$0xff]
      %v222 = vld [vmem:[%s192 + $0xd8] sm:$0x1]
      %v223 = vld [vmem:[%s192 + $0xe0] sm:$0xff]
      %v224 = vld [vmem:[%s192 + $0xe8] sm:$0x1]
      %v225 = vld [vmem:[%s192 + $0xf0] sm:$0xff]
      %v226 = vld [vmem:[%s192 + $0xf8] sm:$0x1]
      %v227 = vld [vmem:[%s192 + $0x100] sm:$0xff]
      %v228 = vld [vmem:[%s192 + $0x108] sm:$0x1]
      %v229 = vld [vmem:[%s192 + $0x110] sm:$0xff]
      %v230 = vld [vmem:[%s192 + $0x118] sm:$0x1]
      %v231 = vld [vmem:[%s192 + $0x120] sm:$0xff]
      %v232 = vld [vmem:[%s192 + $0x128] sm:$0x1]
      %v233 = vld [vmem:[%s192 + $0x130] sm:$0xff]
      %v234 = vld [vmem:[%s192 + $0x138] sm:$0x1]
      %v235 = vld [vmem:[%s192 + $0x140] sm:$0xff]
      %v236 = vld [vmem:[%s192 + $0x148] sm:$0x1]
      %v237 = vld [vmem:[%s192 + $0x150] sm:$0xff]
      %v238 = vld [vmem:[%s192 + $0x158] sm:$0x1]
      %v239 = vld [vmem:[%s192 + $0x160] sm:$0xff]
      %v240 = vld [vmem:[%s192 + $0x168] sm:$0x1]
      %v241 = vld [vmem:[%s192 + $0x170] sm:$0xff]
      %v242 = vld [vmem:[%s192 + $0x178] sm:$0x1]
      %v243 = vld [vmem:[%s192 + $0x180] sm:$0xff]
      %v244 = vld [vmem:[%s192 + $0x188] sm:$0x1]
      %v245 = vld [vmem:[%s192 + $0x190] sm:$0xff]
      %v246 = vld [vmem:[%s192 + $0x198] sm:$0x1]
      %v247 = vld [vmem:[%s192 + $0x1a0] sm:$0xff]
      %v248 = vld [vmem:[%s192 + $0x1a8] sm:$0x1]
      %v249 = vld [vmem:[%s192 + $0x1b0] sm:$0xff]
      %v250 = vld [vmem:[%s192 + $0x1b8] sm:$0x1]
      %v251 = vld [vmem:[%s192 + $0x1c0] sm:$0xff]
      %v252 = vld [vmem:[%s192 + $0x1c8] sm:$0x1]
      %v253 = vld [vmem:[%s192 + $0x1d0] sm:$0xff]
      %v254 = vld [vmem:[%s192 + $0x1d8] sm:$0x1]
      %v255 = vld [vmem:[%s192 + $0x1e0] sm:$0xff]
      %v256 = vld [vmem:[%s192 + $0x1e8] sm:$0x1]
      %v257 = vld [vmem:[%s192 + $0x1f0] sm:$0xff]
      %v258 = vld [vmem:[%s192 + $0x1f8] sm:$0x1]
      %v259 = vld [vmem:[%s192 + $0x200] sm:$0xff]
      %v260 = vld [vmem:[%s192 + $0x208] sm:$0x1]
      %v261 = vld [vmem:[%s192 + $0x210] sm:$0xff]
      %v262 = vld [vmem:[%s192 + $0x218] sm:$0x1]
      %v263 = vld [vmem:[%s192 + $0x220] sm:$0xff]
      %v264 = vld [vmem:[%s192 + $0x228] sm:$0x1]
      %v265 = vld [vmem:[%s192 + $0x230] sm:$0xff]
      %v266 = vld [vmem:[%s192 + $0x238] sm:$0x1]
      %vm283 = vcmask 1046528
      %v284 = vrot.slane %v231, 1
      %v285 = vrot.slane %v232, 1
      %v286 = vsel %vm283, %v284, %v285
      %v287 = vrot.slane %v233, 1
      %v288 = vrot.slane %v234, 1
      %v289 = vsel %vm283, %v287, %v288
      %v290 = vrot.slane %v235, 1
      %v291 = vrot.slane %v236, 1
      %v292 = vsel %vm283, %v290, %v291
      %v293 = vrot.slane %v237, 1
      %v294 = vrot.slane %v238, 1
      %v295 = vsel %vm283, %v293, %v294
      %v296 = vrot.slane %v239, 1
      %v297 = vrot.slane %v240, 1
      %v298 = vsel %vm283, %v296, %v297
      %v299 = vrot.slane %v241, 1
      %v300 = vrot.slane %v242, 1
      %v301 = vsel %vm283, %v299, %v300
      %v302 = vrot.slane %v243, 1
      %v303 = vrot.slane %v244, 1
      %v304 = vsel %vm283, %v302, %v303
      %v305 = vrot.slane %v245, 1
      %v306 = vrot.slane %v246, 1
      %v307 = vsel %vm283, %v305, %v306
      %308 = vrot.lane.b32.xlu0 %v286, 4
      %v309 = vpop.permute.xlu0 %308
      %310 = vrot.lane.b32.xlu0 %v289, 4
      %v311 = vpop.permute.xlu0 %310
      %312 = vrot.lane.b32.xlu0 %v292, 4
      %v313 = vpop.permute.xlu0 %312
      %314 = vrot.lane.b32.xlu0 %v295, 4
      %v315 = vpop.permute.xlu0 %314
      %316 = vrot.lane.b32.xlu0 %v298, 4
      %v317 = vpop.permute.xlu0 %316
      %318 = vrot.lane.b32.xlu0 %v301, 4
      %v319 = vpop.permute.xlu0 %318
      %320 = vrot.lane.b32.xlu0 %v304, 4
      %v321 = vpop.permute.xlu0 %320
      %322 = vrot.lane.b32.xlu0 %v307, 4
      %v323 = vpop.permute.xlu0 %322
      %v348 = vrot.slane %v249, 1
      %v349 = vrot.slane %v250, 1
      %v350 = vsel %vm283, %v348, %v349
      %v351 = vrot.slane %v251, 1
      %v352 = vrot.slane %v252, 1
      %v353 = vsel %vm283, %v351, %v352
      %v354 = vrot.slane %v253, 1
      %v355 = vrot.slane %v254, 1
      %v356 = vsel %vm283, %v354, %v355
      %v357 = vrot.slane %v255, 1
      %v358 = vrot.slane %v256, 1
      %v359 = vsel %vm283, %v357, %v358
      %v360 = vrot.slane %v257, 1
      %v361 = vrot.slane %v258, 1
      %v362 = vsel %vm283, %v360, %v361
      %v363 = vrot.slane %v259, 1
      %v364 = vrot.slane %v260, 1
      %v365 = vsel %vm283, %v363, %v364
      %v366 = vrot.slane %v261, 1
      %v367 = vrot.slane %v262, 1
      %v368 = vsel %vm283, %v366, %v367
      %v369 = vrot.slane %v263, 1
      %v370 = vrot.slane %v264, 1
      %v371 = vsel %vm283, %v369, %v370
      %372 = vrot.lane.b32.xlu0 %v350, 8
      %v373 = vpop.permute.xlu0 %372
      %374 = vrot.lane.b32.xlu0 %v353, 8
      %v375 = vpop.permute.xlu0 %374
      %376 = vrot.lane.b32.xlu0 %v356, 8
      %v377 = vpop.permute.xlu0 %376
      %378 = vrot.lane.b32.xlu0 %v359, 8
      %v379 = vpop.permute.xlu0 %378
      %380 = vrot.lane.b32.xlu0 %v362, 8
      %v381 = vpop.permute.xlu0 %380
      %382 = vrot.lane.b32.xlu0 %v365, 8
      %v383 = vpop.permute.xlu0 %382
      %384 = vrot.lane.b32.xlu0 %v368, 8
      %v385 = vpop.permute.xlu0 %384
      %386 = vrot.lane.b32.xlu0 %v371, 8
      %v387 = vpop.permute.xlu0 %386
      %404 = vrot.lane.b32.xlu0 %v215, 12
      %v405 = vpop.permute.xlu0 %404
      %406 = vrot.lane.b32.xlu0 %v217, 12
      %v407 = vpop.permute.xlu0 %406
      %408 = vrot.lane.b32.xlu0 %v219, 12
      %v409 = vpop.permute.xlu0 %408
      %410 = vrot.lane.b32.xlu0 %v221, 12
      %v411 = vpop.permute.xlu0 %410
      %412 = vrot.lane.b32.xlu0 %v223, 12
      %v413 = vpop.permute.xlu0 %412
      %414 = vrot.lane.b32.xlu0 %v225, 12
      %v415 = vpop.permute.xlu0 %414
      %416 = vrot.lane.b32.xlu0 %v227, 12
      %v417 = vpop.permute.xlu0 %416
      %418 = vrot.lane.b32.xlu0 %v229, 12
      %v419 = vpop.permute.xlu0 %418
      %v444 = vrot.slane %v199, 1
      %v445 = vrot.slane %v200, 1
      %v446 = vsel %vm283, %v444, %v445
      %v447 = vrot.slane %v201, 1
      %v448 = vrot.slane %v202, 1
      %v449 = vsel %vm283, %v447, %v448
      %v450 = vrot.slane %v203, 1
      %v451 = vrot.slane %v204, 1
      %v452 = vsel %vm283, %v450, %v451
      %v453 = vrot.slane %v205, 1
      %v454 = vrot.slane %v206, 1
      %v455 = vsel %vm283, %v453, %v454
      %v456 = vrot.slane %v207, 1
      %v457 = vrot.slane %v208, 1
      %v458 = vsel %vm283, %v456, %v457
      %v459 = vrot.slane %v209, 1
      %v460 = vrot.slane %v210, 1
      %v461 = vsel %vm283, %v459, %v460
      %v462 = vrot.slane %v211, 1
      %v463 = vrot.slane %v212, 1
      %v464 = vsel %vm283, %v462, %v463
      %v465 = vrot.slane %v213, 1
      %v466 = vrot.slane %v214, 1
      %v467 = vsel %vm283, %v465, %v466
      %468 = vrot.lane.b32.xlu0 %v446, 16
      %v469 = vpop.permute.xlu0 %468
      %470 = vrot.lane.b32.xlu0 %v449, 16
      %v471 = vpop.permute.xlu0 %470
      %472 = vrot.lane.b32.xlu0 %v452, 16
      %v473 = vpop.permute.xlu0 %472
      %474 = vrot.lane.b32.xlu0 %v455, 16
      %v475 = vpop.permute.xlu0 %474
      %476 = vrot.lane.b32.xlu0 %v458, 16
      %v477 = vpop.permute.xlu0 %476
      %478 = vrot.lane.b32.xlu0 %v461, 16
      %v479 = vpop.permute.xlu0 %478
      %480 = vrot.lane.b32.xlu0 %v464, 16
      %v481 = vpop.permute.xlu0 %480
      %482 = vrot.lane.b32.xlu0 %v467, 16
      %v483 = vpop.permute.xlu0 %482
      %v500 = vrot.slane %v215, 1
      %v501 = vrot.slane %v216, 1
      %v502 = vsel %vm283, %v500, %v501
      %v503 = vrot.slane %v217, 1
      %v504 = vrot.slane %v218, 1
      %v505 = vsel %vm283, %v503, %v504
      %v506 = vrot.slane %v219, 1
      %v507 = vrot.slane %v220, 1
      %v508 = vsel %vm283, %v506, %v507
      %v509 = vrot.slane %v221, 1
      %v510 = vrot.slane %v222, 1
      %v511 = vsel %vm283, %v509, %v510
      %v512 = vrot.slane %v223, 1
      %v513 = vrot.slane %v224, 1
      %v514 = vsel %vm283, %v512, %v513
      %v515 = vrot.slane %v225, 1
      %v516 = vrot.slane %v226, 1
      %v517 = vsel %vm283, %v515, %v516
      %v518 = vrot.slane %v227, 1
      %v519 = vrot.slane %v228, 1
      %v520 = vsel %vm283, %v518, %v519
      %v521 = vrot.slane %v229, 1
      %v522 = vrot.slane %v230, 1
      %v523 = vsel %vm283, %v521, %v522
      %524 = vrot.lane.b32.xlu0 %v502, 20
      %v525 = vpop.permute.xlu0 %524
      %526 = vrot.lane.b32.xlu0 %v505, 20
      %v527 = vpop.permute.xlu0 %526
      %528 = vrot.lane.b32.xlu0 %v508, 20
      %v529 = vpop.permute.xlu0 %528
      %530 = vrot.lane.b32.xlu0 %v511, 20
      %v531 = vpop.permute.xlu0 %530
      %532 = vrot.lane.b32.xlu0 %v514, 20
      %v533 = vpop.permute.xlu0 %532
      %534 = vrot.lane.b32.xlu0 %v517, 20
      %v535 = vpop.permute.xlu0 %534
      %536 = vrot.lane.b32.xlu0 %v520, 20
      %v537 = vpop.permute.xlu0 %536
      %538 = vrot.lane.b32.xlu0 %v523, 20
      %v539 = vpop.permute.xlu0 %538
      %549 = vrot.lane.b32.xlu0 %v251, 24
      %v550 = vpop.permute.xlu0 %549
      %551 = vrot.lane.b32.xlu0 %v253, 24
      %v552 = vpop.permute.xlu0 %551
      %553 = vrot.lane.b32.xlu0 %v255, 24
      %v554 = vpop.permute.xlu0 %553
      %555 = vrot.lane.b32.xlu0 %v257, 24
      %v556 = vpop.permute.xlu0 %555
      %557 = vrot.lane.b32.xlu0 %v259, 24
      %v558 = vpop.permute.xlu0 %557
      %559 = vrot.lane.b32.xlu0 %v261, 24
      %v560 = vpop.permute.xlu0 %559
      %561 = vrot.lane.b32.xlu0 %v263, 24
      %v562 = vpop.permute.xlu0 %561
      %563 = vrot.lane.b32.xlu0 %v265, 24
      %v564 = vpop.permute.xlu0 %563
      %v575 = vrot.slane %v247, 1
      %v576 = vrot.slane %v248, 1
      %v577 = vsel %vm283, %v575, %v576
      %578 = vrot.lane.b32.xlu0 %v289, 28
      %v579 = vpop.permute.xlu0 %578
      %580 = vrot.lane.b32.xlu0 %v292, 28
      %v581 = vpop.permute.xlu0 %580
      %582 = vrot.lane.b32.xlu0 %v295, 28
      %v583 = vpop.permute.xlu0 %582
      %584 = vrot.lane.b32.xlu0 %v298, 28
      %v585 = vpop.permute.xlu0 %584
      %586 = vrot.lane.b32.xlu0 %v301, 28
      %v587 = vpop.permute.xlu0 %586
      %588 = vrot.lane.b32.xlu0 %v304, 28
      %v589 = vpop.permute.xlu0 %588
      %590 = vrot.lane.b32.xlu0 %v307, 28
      %v591 = vpop.permute.xlu0 %590
      %592 = vrot.lane.b32.xlu0 %v577, 28
      %v593 = vpop.permute.xlu0 %592
      %v603 = vrot.slane %v265, 1
      %v604 = vrot.slane %v266, 1
      %v605 = vsel %vm283, %v603, %v604
      %606 = vrot.lane.b32.xlu0 %v353, 32
      %v607 = vpop.permute.xlu0 %606
      %608 = vrot.lane.b32.xlu0 %v356, 32
      %v609 = vpop.permute.xlu0 %608
      %610 = vrot.lane.b32.xlu0 %v359, 32
      %v611 = vpop.permute.xlu0 %610
      %612 = vrot.lane.b32.xlu0 %v362, 32
      %v613 = vpop.permute.xlu0 %612
      %614 = vrot.lane.b32.xlu0 %v365, 32
      %v615 = vpop.permute.xlu0 %614
      %616 = vrot.lane.b32.xlu0 %v368, 32
      %v617 = vpop.permute.xlu0 %616
      %618 = vrot.lane.b32.xlu0 %v371, 32
      %v619 = vpop.permute.xlu0 %618
      %620 = vrot.lane.b32.xlu0 %v605, 32
      %v621 = vpop.permute.xlu0 %620
      %vm630 = vcmask 31744
      %v631 = vsel %vm630, %v249, %v309
      %v632 = vsel %vm630, %v251, %v311
      %v633 = vsel %vm630, %v253, %v313
      %v634 = vsel %vm630, %v255, %v315
      %v635 = vsel %vm630, %v257, %v317
      %v636 = vsel %vm630, %v259, %v319
      %v637 = vsel %vm630, %v261, %v321
      %v638 = vsel %vm630, %v263, %v323
      %vm639 = vcmask 64512
      %v640 = vsel %vm639, %v631, %v373
      %v641 = vsel %vm639, %v632, %v375
      %v642 = vsel %vm639, %v633, %v377
      %v643 = vsel %vm639, %v634, %v379
      %v644 = vsel %vm639, %v635, %v381
      %v645 = vsel %vm639, %v636, %v383
      %v646 = vsel %vm639, %v637, %v385
      %v647 = vsel %vm639, %v638, %v387
      %vm648 = vcmask 97280
      %v649 = vsel %vm648, %v640, %v405
      %v650 = vsel %vm648, %v641, %v407
      %v651 = vsel %vm648, %v642, %v409
      %v652 = vsel %vm648, %v643, %v411
      %v653 = vsel %vm648, %v644, %v413
      %v654 = vsel %vm648, %v645, %v415
      %v655 = vsel %vm648, %v646, %v417
      %v656 = vsel %vm648, %v647, %v419
      %vm657 = vcmask 130048
      %v658 = vsel %vm657, %v649, %v469
      %v659 = vsel %vm657, %v650, %v471
      %v660 = vsel %vm657, %v651, %v473
      %v661 = vsel %vm657, %v652, %v475
      %v662 = vsel %vm657, %v653, %v477
      %v663 = vsel %vm657, %v654, %v479
      %v664 = vsel %vm657, %v655, %v481
      %v665 = vsel %vm657, %v656, %v483
      %vm666 = vcmask 162816
      %v667 = vsel %vm666, %v658, %v525
      %v668 = vsel %vm666, %v659, %v527
      %v669 = vsel %vm666, %v660, %v529
      %v670 = vsel %vm666, %v661, %v531
      %v671 = vsel %vm666, %v662, %v533
      %v672 = vsel %vm666, %v663, %v535
      %v673 = vsel %vm666, %v664, %v537
      %v674 = vsel %vm666, %v665, %v539
      %vm675 = vcmask 195584
      %v676 = vsel %vm675, %v667, %v550
      %v677 = vsel %vm675, %v668, %v552
      %v678 = vsel %vm675, %v669, %v554
      %v679 = vsel %vm675, %v670, %v556
      %v680 = vsel %vm675, %v671, %v558
      %v681 = vsel %vm675, %v672, %v560
      %v682 = vsel %vm675, %v673, %v562
      %v683 = vsel %vm675, %v674, %v564
      %vm684 = vcmask 228352
      %v685 = vsel %vm684, %v676, %v579
      %v686 = vsel %vm684, %v677, %v581
      %v687 = vsel %vm684, %v678, %v583
      %v688 = vsel %vm684, %v679, %v585
      %v689 = vsel %vm684, %v680, %v587
      %v690 = vsel %vm684, %v681, %v589
      %v691 = vsel %vm684, %v682, %v591
      %v692 = vsel %vm684, %v683, %v593
      %vm693 = vcmask 261120
      %v694 = vsel %vm693, %v685, %v607
      %v695 = vsel %vm693, %v686, %v609
      %v696 = vsel %vm693, %v687, %v611
      %v697 = vsel %vm693, %v688, %v613
      %v698 = vsel %vm693, %v689, %v615
      %v699 = vsel %vm693, %v690, %v617
      %v700 = vsel %vm693, %v691, %v619
      %v701 = vsel %vm693, %v692, %v621
      %v702 = vpack.c.bf16 %v695, %v694
      %v703 = vpack.c.bf16 %v697, %v696
      %v704 = vpack.c.bf16 %v699, %v698
      %v705 = vpack.c.bf16 %v701, %v700
      %v706 = vld [vmem:[%s1] sm:$0xf]
      %v707 = vld [vmem:[%s1 + $0x4] sm:$0xf]
      %v708 = vld [vmem:[%s1 + $0x8] sm:$0xf]
      %v709 = vld [vmem:[%s1 + $0xc] sm:$0xf]
      %v710 = vld [vmem:[%s1 + $0x10] sm:$0x3]
      %v716 = vunpack.c.l.b16 %v706
      %v717 = vunpack.c.l.b16 %v707
      %v718 = vunpack.c.l.b16 %v708
      %v719 = vunpack.c.l.b16 %v709
      %v720 = vunpack.c.l.b16 %v710
      %v721 = vpack.c.b16 %v717, %v716
      %v722 = vpack.c.b16 %v719, %v718
      %v723 = vpack.c.b16 %v720, %v720
      %vm726 = vcmask 293888
      %v728 = vsel %vm726, %v702, 0
      %v731 = vsel %vm726, %v703, 0
      %v734 = vsel %vm726, %v704, 0
      %v737 = vsel %vm726, %v705, 0
      %vm739 = vcmask 1041408
      %v741 = vsel %vm739, %v723, 0
      %743 = vmatprep.subr.bf16.mxu0 0
      %744 = vmatpush1.bf16.msra.mxu0 0
      %745 = vmatprep.subr.bf16.mxu0 0
      %746 = vmatpush1.bf16.msra.mxu0 0
      %747 = vmatprep.subr.bf16.mxu0 0
      %748 = vmatpush1.bf16.msra.mxu0 0
      %749 = vmatprep.subr.bf16.mxu0 0
      %750 = vmatpush1.bf16.msra.mxu0 0
      %751 = vmatprep.subr.bf16.mxu0 0
      %752 = vmatpush1.bf16.msra.mxu0 0
      %753 = vmatprep.subr.bf16.mxu0 0
      %754 = vmatpush1.bf16.msra.mxu0 %v741
      %755 = vmatprep.subr.bf16.mxu0 0
      %756 = vmatpush1.bf16.msra.mxu0 %v722
      %757 = vmatprep.subr.bf16.mxu0 0
      %758 = vmatpush1.bf16.msra.mxu0 %v721
      %759 = vmatprep.subr.bf16.mxu0 0
      %760 = vmatpush2.bf16.msra.mxu0 0
      %761 = vmatprep.subr.bf16.mxu0 0
      %762 = vmatpush2.bf16.msra.mxu0 0
      %763 = vmatprep.subr.bf16.mxu0 0
      %764 = vmatpush2.bf16.msra.mxu0 0
      %765 = vmatprep.subr.bf16.mxu0 0
      %766 = vmatpush2.bf16.msra.mxu0 0
      %767 = vmatprep.subr.bf16.mxu0 0
      %768 = vmatpush2.bf16.msra.mxu0 0
      %769 = vmatprep.subr.bf16.mxu0 0
      %770 = vmatpush2.bf16.msra.mxu0 0
      %771 = vmatprep.subr.bf16.mxu0 0
      %772 = vmatpush2.bf16.msra.mxu0 0
      %773 = vmatprep.subr.bf16.mxu0 0
      %774 = vmatpush2.bf16.msra.mxu0 0
      %775 = vmatprep.mubr.bf16.mxu0 0
      %776 = vmatmul.mubr.bf16.gmra.mxu0 %v728
      %v777 = vpop.f32.mrf.mxu0
      %v778 = vadd.f32 0.0, %v777
      %v779 = vpop.f32.mrf.mxu0
      %v780 = vpop.f32.mrf.mxu0
      %v781 = vadd.f32 0.0, %v780
      %v782 = vpop.f32.mrf.mxu0
      %783 = vmatprep.mubr.bf16.mxu0 0
      %784 = vmatmul.mubr.bf16.gmra.mxu0 %v731
      %v785 = vpop.f32.mrf.mxu0
      %v786 = vadd.f32 0.0, %v785
      %v787 = vpop.f32.mrf.mxu0
      %v788 = vpop.f32.mrf.mxu0
      %v789 = vadd.f32 0.0, %v788
      %v790 = vpop.f32.mrf.mxu0
      %791 = vmatprep.mubr.bf16.mxu0 0
      %792 = vmatmul.mubr.bf16.gmra.mxu0 %v734
      %v793 = vpop.f32.mrf.mxu0
      %v794 = vadd.f32 0.0, %v793
      %v795 = vpop.f32.mrf.mxu0
      %v796 = vpop.f32.mrf.mxu0
      %v797 = vadd.f32 0.0, %v796
      %v798 = vpop.f32.mrf.mxu0
      %799 = vmatprep.mubr.bf16.mxu0 0
      %800 = vmatmul.mubr.bf16.gmra.mxu0 %v737
      %v801 = vpop.f32.mrf.mxu0
      %v802 = vadd.f32 0.0, %v801
      %v803 = vpop.f32.mrf.mxu0
      %v804 = vpop.f32.mrf.mxu0
      %v805 = vadd.f32 0.0, %v804
      %v806 = vpop.f32.mrf.mxu0
      %807 = vdwg.mxu0
      %v808 = vld [vmem:[%s2] sm:$0x1]
      %v810 = vlaneseq
      %v811 = vshrl.u32 %v810, 7
      %v812 = vsub.s32 0, %v811
      %v813 = vrot.slane %v808, %v812
      %v815 = vmul.f32 %v778, %v813
      %v816 = vmul.f32 %v781, %v813
      %v817 = vmul.f32 %v786, %v813
      %v818 = vmul.f32 %v789, %v813
      %v819 = vmul.f32 %v794, %v813
      %v820 = vmul.f32 %v797, %v813
      %v821 = vmul.f32 %v802, %v813
      %v822 = vmul.f32 %v805, %v813
      %v823 = vld [vmem:[%s3] sm:$0x1]
      %v825 = vlaneseq
      %v826 = vshrl.u32 %v825, 7
      %v827 = vsub.s32 0, %v826
      %v828 = vrot.slane %v823, %v827
      %v830 = vadd.f32 %v815, %v828
      %v831 = vadd.f32 %v816, %v828
      %v832 = vadd.f32 %v817, %v828
      %v833 = vadd.f32 %v818, %v828
      %v834 = vadd.f32 %v819, %v828
      %v835 = vadd.f32 %v820, %v828
      %v836 = vadd.f32 %v821, %v828
      %v837 = vadd.f32 %v822, %v828
      %v838 = vmul.f32 %v830, 0.5
      %v839 = vmul.f32 %v831, 0.5
      %v840 = vmul.f32 %v832, 0.5
      %v841 = vmul.f32 %v833, 0.5
      %v842 = vmul.f32 %v834, 0.5
      %v843 = vmul.f32 %v835, 0.5
      %v844 = vmul.f32 %v836, 0.5
      %v845 = vmul.f32 %v837, 0.5
      %v846 = vrcp.pop 1.4142135
      %v847 = vmul.f32 %v830, %v846
      %v848 = vmul.f32 %v831, %v846
      %v849 = vmul.f32 %v832, %v846
      %v850 = vmul.f32 %v833, %v846
      %v851 = vmul.f32 %v834, %v846
      %v852 = vmul.f32 %v835, %v846
      %v853 = vmul.f32 %v836, %v846
      %v854 = vmul.f32 %v837, %v846
      %v855 = verf.f32.pop %v847
      %v856 = verf.f32.pop %v848
      %v857 = verf.f32.pop %v849
      %v858 = verf.f32.pop %v850
      %v859 = verf.f32.pop %v851
      %v860 = verf.f32.pop %v852
      %v861 = verf.f32.pop %v853
      %v862 = verf.f32.pop %v854
      %v863 = vadd.f32 %v855, 1.0
      %v864 = vadd.f32 %v856, 1.0
      %v865 = vadd.f32 %v857, 1.0
      %v866 = vadd.f32 %v858, 1.0
      %v867 = vadd.f32 %v859, 1.0
      %v868 = vadd.f32 %v860, 1.0
      %v869 = vadd.f32 %v861, 1.0
      %v870 = vadd.f32 %v862, 1.0
      %v871 = vmul.f32 %v838, %v863
      %v872 = vmul.f32 %v839, %v864
      %v873 = vmul.f32 %v840, %v865
      %v874 = vmul.f32 %v841, %v866
      %v875 = vmul.f32 %v842, %v867
      %v876 = vmul.f32 %v843, %v868
      %v877 = vmul.f32 %v844, %v869
      %v878 = vmul.f32 %v845, %v870
      %v911 = vadd.f32 %v446, %v502
      %v912 = vadd.f32 %v449, %v505
      %v913 = vadd.f32 %v452, %v508
      %v914 = vadd.f32 %v455, %v511
      %v915 = vadd.f32 %v458, %v514
      %v916 = vadd.f32 %v461, %v517
      %v917 = vadd.f32 %v464, %v520
      %v918 = vadd.f32 %v467, %v523
      %v919 = vadd.f32 %v911, %v289
      %v920 = vadd.f32 %v912, %v292
      %v921 = vadd.f32 %v913, %v295
      %v922 = vadd.f32 %v914, %v298
      %v923 = vadd.f32 %v915, %v301
      %v924 = vadd.f32 %v916, %v304
      %v925 = vadd.f32 %v917, %v307
      %v926 = vadd.f32 %v918, %v577
      %v927 = vadd.f32 %v919, %v353
      %v928 = vadd.f32 %v920, %v356
      %v929 = vadd.f32 %v921, %v359
      %v930 = vadd.f32 %v922, %v362
      %v931 = vadd.f32 %v923, %v365
      %v932 = vadd.f32 %v924, %v368
      %v933 = vadd.f32 %v925, %v371
      %v934 = vadd.f32 %v926, %v605
      %v935 = vmul.f32 %v927, 0.5
      %v936 = vmul.f32 %v928, 0.5
      %v937 = vmul.f32 %v929, 0.5
      %v938 = vmul.f32 %v930, 0.5
      %v939 = vmul.f32 %v931, 0.5
      %v940 = vmul.f32 %v932, 0.5
      %v941 = vmul.f32 %v933, 0.5
      %v942 = vmul.f32 %v934, 0.5
      %v943 = vsub.f32 %v911, %v289
      %v944 = vsub.f32 %v912, %v292
      %v945 = vsub.f32 %v913, %v295
      %v946 = vsub.f32 %v914, %v298
      %v947 = vsub.f32 %v915, %v301
      %v948 = vsub.f32 %v916, %v304
      %v949 = vsub.f32 %v917, %v307
      %v950 = vsub.f32 %v918, %v577
      %v951 = vsub.f32 %v943, %v353
      %v952 = vsub.f32 %v944, %v356
      %v953 = vsub.f32 %v945, %v359
      %v954 = vsub.f32 %v946, %v362
      %v955 = vsub.f32 %v947, %v365
      %v956 = vsub.f32 %v948, %v368
      %v957 = vsub.f32 %v949, %v371
      %v958 = vsub.f32 %v950, %v605
      %v959 = vmul.f32 %v951, 0.5
      %v960 = vmul.f32 %v952, 0.5
      %v961 = vmul.f32 %v953, 0.5
      %v962 = vmul.f32 %v954, 0.5
      %v963 = vmul.f32 %v955, 0.5
      %v964 = vmul.f32 %v956, 0.5
      %v965 = vmul.f32 %v957, 0.5
      %v966 = vmul.f32 %v958, 0.5
      %v967 = vsub.f32 %v446, %v502
      %v968 = vsub.f32 %v449, %v505
      %v969 = vsub.f32 %v452, %v508
      %v970 = vsub.f32 %v455, %v511
      %v971 = vsub.f32 %v458, %v514
      %v972 = vsub.f32 %v461, %v517
      %v973 = vsub.f32 %v464, %v520
      %v974 = vsub.f32 %v467, %v523
      %v975 = vadd.f32 %v967, %v289
      %v976 = vadd.f32 %v968, %v292
      %v977 = vadd.f32 %v969, %v295
      %v978 = vadd.f32 %v970, %v298
      %v979 = vadd.f32 %v971, %v301
      %v980 = vadd.f32 %v972, %v304
      %v981 = vadd.f32 %v973, %v307
      %v982 = vadd.f32 %v974, %v577
      %v983 = vsub.f32 %v975, %v353
      %v984 = vsub.f32 %v976, %v356
      %v985 = vsub.f32 %v977, %v359
      %v986 = vsub.f32 %v978, %v362
      %v987 = vsub.f32 %v979, %v365
      %v988 = vsub.f32 %v980, %v368
      %v989 = vsub.f32 %v981, %v371
      %v990 = vsub.f32 %v982, %v605
      %v991 = vmul.f32 %v983, 0.5
      %v992 = vmul.f32 %v984, 0.5
      %v993 = vmul.f32 %v985, 0.5
      %v994 = vmul.f32 %v986, 0.5
      %v995 = vmul.f32 %v987, 0.5
      %v996 = vmul.f32 %v988, 0.5
      %v997 = vmul.f32 %v989, 0.5
      %v998 = vmul.f32 %v990, 0.5
      %v999 = vsub.f32 %v967, %v289
      %v1000 = vsub.f32 %v968, %v292
      %v1001 = vsub.f32 %v969, %v295
      %v1002 = vsub.f32 %v970, %v298
      %v1003 = vsub.f32 %v971, %v301
      %v1004 = vsub.f32 %v972, %v304
      %v1005 = vsub.f32 %v973, %v307
      %v1006 = vsub.f32 %v974, %v577
      %v1007 = vadd.f32 %v999, %v353
      %v1008 = vadd.f32 %v1000, %v356
      %v1009 = vadd.f32 %v1001, %v359
      %v1010 = vadd.f32 %v1002, %v362
      %v1011 = vadd.f32 %v1003, %v365
      %v1012 = vadd.f32 %v1004, %v368
      %v1013 = vadd.f32 %v1005, %v371
      %v1014 = vadd.f32 %v1006, %v605
      %v1015 = vmul.f32 %v1007, 0.5
      %v1016 = vmul.f32 %v1008, 0.5
      %v1017 = vmul.f32 %v1009, 0.5
      %v1018 = vmul.f32 %v1010, 0.5
      %v1019 = vmul.f32 %v1011, 0.5
      %v1020 = vmul.f32 %v1012, 0.5
      %v1021 = vmul.f32 %v1013, 0.5
      %v1022 = vmul.f32 %v1014, 0.5
      %1031 = vrot.lane.b32.xlu0 %v935, 16
      %v1032 = vpop.permute.xlu0 %1031
      %1033 = vrot.lane.b32.xlu0 %v936, 16
      %v1034 = vpop.permute.xlu0 %1033
      %1035 = vrot.lane.b32.xlu0 %v937, 16
      %v1036 = vpop.permute.xlu0 %1035
      %1037 = vrot.lane.b32.xlu0 %v938, 16
      %v1038 = vpop.permute.xlu0 %1037
      %1039 = vrot.lane.b32.xlu0 %v939, 16
      %v1040 = vpop.permute.xlu0 %1039
      %1041 = vrot.lane.b32.xlu0 %v940, 16
      %v1042 = vpop.permute.xlu0 %1041
      %1043 = vrot.lane.b32.xlu0 %v941, 16
      %v1044 = vpop.permute.xlu0 %1043
      %1045 = vrot.lane.b32.xlu0 %v942, 16
      %v1046 = vpop.permute.xlu0 %1045
      %1063 = vrot.lane.b32.xlu0 %v959, 20
      %v1064 = vpop.permute.xlu0 %1063
      %1065 = vrot.lane.b32.xlu0 %v960, 20
      %v1066 = vpop.permute.xlu0 %1065
      %1067 = vrot.lane.b32.xlu0 %v961, 20
      %v1068 = vpop.permute.xlu0 %1067
      %1069 = vrot.lane.b32.xlu0 %v962, 20
      %v1070 = vpop.permute.xlu0 %1069
      %1071 = vrot.lane.b32.xlu0 %v963, 20
      %v1072 = vpop.permute.xlu0 %1071
      %1073 = vrot.lane.b32.xlu0 %v964, 20
      %v1074 = vpop.permute.xlu0 %1073
      %1075 = vrot.lane.b32.xlu0 %v965, 20
      %v1076 = vpop.permute.xlu0 %1075
      %1077 = vrot.lane.b32.xlu0 %v966, 20
      %v1078 = vpop.permute.xlu0 %1077
      %1095 = vrot.lane.b32.xlu0 %v991, 24
      %v1096 = vpop.permute.xlu0 %1095
      %1097 = vrot.lane.b32.xlu0 %v992, 24
      %v1098 = vpop.permute.xlu0 %1097
      %1099 = vrot.lane.b32.xlu0 %v993, 24
      %v1100 = vpop.permute.xlu0 %1099
      %1101 = vrot.lane.b32.xlu0 %v994, 24
      %v1102 = vpop.permute.xlu0 %1101
      %1103 = vrot.lane.b32.xlu0 %v995, 24
      %v1104 = vpop.permute.xlu0 %1103
      %1105 = vrot.lane.b32.xlu0 %v996, 24
      %v1106 = vpop.permute.xlu0 %1105
      %1107 = vrot.lane.b32.xlu0 %v997, 24
      %v1108 = vpop.permute.xlu0 %1107
      %1109 = vrot.lane.b32.xlu0 %v998, 24
      %v1110 = vpop.permute.xlu0 %1109
      %1127 = vrot.lane.b32.xlu0 %v1015, 28
      %v1128 = vpop.permute.xlu0 %1127
      %1129 = vrot.lane.b32.xlu0 %v1016, 28
      %v1130 = vpop.permute.xlu0 %1129
      %1131 = vrot.lane.b32.xlu0 %v1017, 28
      %v1132 = vpop.permute.xlu0 %1131
      %1133 = vrot.lane.b32.xlu0 %v1018, 28
      %v1134 = vpop.permute.xlu0 %1133
      %1135 = vrot.lane.b32.xlu0 %v1019, 28
      %v1136 = vpop.permute.xlu0 %1135
      %1137 = vrot.lane.b32.xlu0 %v1020, 28
      %v1138 = vpop.permute.xlu0 %1137
      %1139 = vrot.lane.b32.xlu0 %v1021, 28
      %v1140 = vpop.permute.xlu0 %1139
      %1141 = vrot.lane.b32.xlu0 %v1022, 28
      %v1142 = vpop.permute.xlu0 %1141
      %v1151 = vsel %vm657, %v871, %v1032
      %v1152 = vsel %vm657, %v872, %v1034
      %v1153 = vsel %vm657, %v873, %v1036
      %v1154 = vsel %vm657, %v874, %v1038
      %v1155 = vsel %vm657, %v875, %v1040
      %v1156 = vsel %vm657, %v876, %v1042
      %v1157 = vsel %vm657, %v877, %v1044
      %v1158 = vsel %vm657, %v878, %v1046
      %v1159 = vsel %vm666, %v1151, %v1064
      %v1160 = vsel %vm666, %v1152, %v1066
      %v1161 = vsel %vm666, %v1153, %v1068
      %v1162 = vsel %vm666, %v1154, %v1070
      %v1163 = vsel %vm666, %v1155, %v1072
      %v1164 = vsel %vm666, %v1156, %v1074
      %v1165 = vsel %vm666, %v1157, %v1076
      %v1166 = vsel %vm666, %v1158, %v1078
      %v1167 = vsel %vm675, %v1159, %v1096
      %v1168 = vsel %vm675, %v1160, %v1098
      %v1169 = vsel %vm675, %v1161, %v1100
      %v1170 = vsel %vm675, %v1162, %v1102
      %v1171 = vsel %vm675, %v1163, %v1104
      %v1172 = vsel %vm675, %v1164, %v1106
      %v1173 = vsel %vm675, %v1165, %v1108
      %v1174 = vsel %vm675, %v1166, %v1110
      %v1175 = vsel %vm684, %v1167, %v1128
      %v1176 = vsel %vm684, %v1168, %v1130
      %v1177 = vsel %vm684, %v1169, %v1132
      %v1178 = vsel %vm684, %v1170, %v1134
      %v1179 = vsel %vm684, %v1171, %v1136
      %v1180 = vsel %vm684, %v1172, %v1138
      %v1181 = vsel %vm684, %v1173, %v1140
      %v1182 = vsel %vm684, %v1174, %v1142
      %1183 = vst.msk [vmem:[%s197] sm:$0xff] %vm693, %v1175
      %1184 = vst.msk [vmem:[%s197 + $0x8] sm:$0xff] %vm693, %v1176
      %1185 = vst.msk [vmem:[%s197 + $0x10] sm:$0xff] %vm693, %v1177
      %1186 = vst.msk [vmem:[%s197 + $0x18] sm:$0xff] %vm693, %v1178
      %1187 = vst.msk [vmem:[%s197 + $0x20] sm:$0xff] %vm693, %v1179
      %1188 = vst.msk [vmem:[%s197 + $0x28] sm:$0xff] %vm693, %v1180
      %1189 = vst.msk [vmem:[%s197 + $0x30] sm:$0xff] %vm693, %v1181
      %1190 = vst.msk [vmem:[%s197 + $0x38] sm:$0xff] %vm693, %v1182
      %p1191 = scmp.lt.s32.totalorder %s15, 1
      %s1192 = scalar_select %p1191, %s15, 1
      %s1193 = smul.addr %s1192, 8
      %s1194 = smul.addr %s1193, 8
      %s1195 = scalar_lea.vmem %s4, %s1194
      // Predicated region
      $region37: #{dw_embedded_forward.2} parent=35 // pred_check
        %p1196 = pneg %p122
      $region38: #{dw_embedded_forward.2} parent=35 // pred_check_branch
        %1198 = sbr.rel (%p1196) target = $region40
      $region39: #{dw_embedded_forward.2} parent=35 // pred_region
        _
      $region40: #{dw_embedded_forward.2} parent=35 // pred_fallthru
        _
    $region36: #{dw_embedded_forward.2} parent=5 // pred_fallthru
      _
    %p1199 = scmp.le.s32.totalorder 2, %s10
    // Predicated region
    $region41: #{dw_embedded_forward.2} parent=5 // pred_check
      %p1200 = pneg %p1199
    $region42: #{dw_embedded_forward.2} parent=5 // pred_check_branch
      %1202 = sbr.rel (%p1200) target = $region44
    $region43: #{dw_embedded_forward.2} parent=5 // pred_region
      %s1203 = ssub.s32 %s10, 2
      // Predicated region
      $region45: #{dw_embedded_forward.2} parent=43 // pred_check
        %p1204 = pneg %p128
      $region46: #{dw_embedded_forward.2} parent=43 // pred_check_branch
        %1206 = sbr.rel (%p1204) target = $region48
      $region47: #{dw_embedded_forward.2} parent=43 // pred_region
        %p1207 = scmp.lt.s32.totalorder %s16, 1
        %s1208 = scalar_select %p1207, %s16, 1
        %s1209 = smul.addr %s1208, 8
        %s1210 = smul.addr %s1209, 8
        %s1211 = scalar_lea.vmem %s4, %s1210
      $region48: #{dw_embedded_forward.2} parent=43 // pred_fallthru
        _
    $region44: #{dw_embedded_forward.2} parent=5 // pred_fallthru
      _
  $region6: #{dw_embedded_forward.2} parent=0 // loop_footer
    %s14 = sadd.s32 1, %s10
  $region7: #{dw_embedded_forward.2} parent=0 // loop_footer_branch
    %9 = sbr.rel target = $region3
  $region8: #{dw_embedded_forward.2} parent=0 // loop_exit
    _

// kernel: dw_embedded_forward.3
$region0: #{dw_embedded_forward.3}
  #allocation0 [shape = 'u32[]', space=smem, size = 0x4, offset = 0x4, fixed_abs, tag = 'smem constant byte address 0x4 - core index']
  #allocation1 [shape = 'u32[144,128]{1,0:T(1,128)}', space=vmem, size = 0x12000, scoped, tag = 'internal scratch']
  %s0 = inlined_call_operand.vmem [shape: f32[2,4,5,9,32], index: 0, kind: input, shape index: {}]
  %s1 = inlined_call_operand.vmem [shape: bf16[288,32], index: 1, kind: input, shape index: {}]
  %s2 = inlined_call_operand.vmem [shape: f32[1,32], index: 2, kind: input, shape index: {}]
  %s3 = inlined_call_operand.vmem [shape: f32[1,32], index: 3, kind: input, shape index: {}]
  %s4 = inlined_call_operand.vmem [shape: f32[2,32,32], index: 4, kind: output, shape index: {}]
  %s5 = sld [smem:[#allocation0]]
  $region49: #{dw_embedded_forward.3} parent=0
    _
  %s7 = ssub.s32 1, %s5
  %s8 = scalar_select 0, %s7, %s5
  loop: start=0, step=1, limit=4
  $region2: #{dw_embedded_forward.3} parent=0 // loop_pre_header
    _
  $region3: #{dw_embedded_forward.3} parent=0 // loop_header
    %s10 = sphi 0, %s14
    %p11 = scmp.ge.s32.totalorder %s10, 4
    %s20 = sphi 0, %s22
    %s23 = sphi 0, %s20
    %s24 = sphi 0, %s23
    %s40 = sphi 0, %s24
    %s44 = sphi 0, %s44
    %s46 = sphi 0, %s44
    %s47 = sphi 0, %s46
    %s61 = sphi 0, %s47
    %s65 = sphi 0, %s65
    %s67 = sphi 0, %s65
    %s68 = sphi 0, %s67
    %s82 = sphi 0, %s68
    %s86 = sphi 0, %s86
    %s88 = sphi 0, %s86
    %s89 = sphi 0, %s88
    %s103 = sphi 0, %s89
    %s109 = sphi 0, %s111
    %s112 = sphi 0, %s109
    %s113 = sphi 0, %s112
    %s129 = sphi 0, %s113
  $region4: #{dw_embedded_forward.3} parent=0 // loop_header_branch
    %13 = sbr.rel (%p11) target = $region8
  $region5: #{dw_embedded_forward.3} parent=0 // loop_body
    %s15 = ssub.s32 %s10, 1
    %s16 = ssub.s32 %s10, 2
    %s17 = sadd.s32 %s10, 1
    %s18 = ssub.s32 %s10, %s17
    %p19 = scmp.eq.s32.totalorder %s18, 0
    %s21 = sadd.s32 %s20, 1
    %s22 = scalar_select %p19, %s20, %s21
    %p25 = pneg %p19
    %p26 = scmp.eq.s32.totalorder %s10, 1
    %p27 = por %p25, %p26
    %p28 = scmp.ne.s32.totalorder %s20, %s23
    %p29 = scmp.eq.s32.totalorder %s10, 0
    %p30 = por %p28, %p29
    %p31 = scmp.ne.s32.totalorder %s20, %s23
    %p32 = scmp.eq.s32.totalorder %s15, 1
    %p33 = por %p31, %p32
    %p34 = scmp.ne.s32.totalorder %s23, %s24
    %p35 = scmp.eq.s32.totalorder %s15, 0
    %p36 = por %p34, %p35
    %p37 = scmp.ne.s32.totalorder %s23, %s24
    %p38 = scmp.eq.s32.totalorder %s16, 1
    %p39 = por %p37, %p38
    %p41 = scmp.ne.s32.totalorder %s24, %s40
    %p42 = scmp.eq.s32.totalorder %s16, 0
    %p43 = por %p41, %p42
    %s45 = sadd.s32 %s44, 1
    %p48 = scmp.eq.s32.totalorder %s10, 1
    %p49 = scmp.ne.s32.totalorder %s44, %s46
    %p50 = scmp.eq.s32.totalorder %s10, 0
    %p51 = por %p49, %p50
    %p52 = scmp.ne.s32.totalorder %s44, %s46
    %p53 = scmp.eq.s32.totalorder %s15, 1
    %p54 = por %p52, %p53
    %p55 = scmp.ne.s32.totalorder %s46, %s47
    %p56 = scmp.eq.s32.totalorder %s15, 0
    %p57 = por %p55, %p56
    %p58 = scmp.ne.s32.totalorder %s46, %s47
    %p59 = scmp.eq.s32.totalorder %s16, 1
    %p60 = por %p58, %p59
    %p62 = scmp.ne.s32.totalorder %s47, %s61
    %p63 = scmp.eq.s32.totalorder %s16, 0
    %p64 = por %p62, %p63
    %s66 = sadd.s32 %s65, 1
    %p69 = scmp.eq.s32.totalorder %s10, 1
    %p70 = scmp.ne.s32.totalorder %s65, %s67
    %p71 = scmp.eq.s32.totalorder %s10, 0
    %p72 = por %p70, %p71
    %p73 = scmp.ne.s32.totalorder %s65, %s67
    %p74 = scmp.eq.s32.totalorder %s15, 1
    %p75 = por %p73, %p74
    %p76 = scmp.ne.s32.totalorder %s67, %s68
    %p77 = scmp.eq.s32.totalorder %s15, 0
    %p78 = por %p76, %p77
    %p79 = scmp.ne.s32.totalorder %s67, %s68
    %p80 = scmp.eq.s32.totalorder %s16, 1
    %p81 = por %p79, %p80
    %p83 = scmp.ne.s32.totalorder %s68, %s82
    %p84 = scmp.eq.s32.totalorder %s16, 0
    %p85 = por %p83, %p84
    %s87 = sadd.s32 %s86, 1
    %p90 = scmp.eq.s32.totalorder %s10, 1
    %p91 = scmp.ne.s32.totalorder %s86, %s88
    %p92 = scmp.eq.s32.totalorder %s10, 0
    %p93 = por %p91, %p92
    %p94 = scmp.ne.s32.totalorder %s86, %s88
    %p95 = scmp.eq.s32.totalorder %s15, 1
    %p96 = por %p94, %p95
    %p97 = scmp.ne.s32.totalorder %s88, %s89
    %p98 = scmp.eq.s32.totalorder %s15, 0
    %p99 = por %p97, %p98
    %p100 = scmp.ne.s32.totalorder %s88, %s89
    %p101 = scmp.eq.s32.totalorder %s16, 1
    %p102 = por %p100, %p101
    %p104 = scmp.ne.s32.totalorder %s89, %s103
    %p105 = scmp.eq.s32.totalorder %s16, 0
    %p106 = por %p104, %p105
    %s107 = ssub.s32 %s10, %s17
    %p108 = scmp.eq.s32.totalorder %s107, 0
    %s110 = sadd.s32 %s109, 1
    %s111 = scalar_select %p108, %s109, %s110
    %p114 = pneg %p108
    %p115 = scmp.eq.s32.totalorder %s10, 1
    %p116 = por %p114, %p115
    %p117 = scmp.ne.s32.totalorder %s109, %s112
    %p118 = scmp.eq.s32.totalorder %s10, 0
    %p119 = por %p117, %p118
    %p120 = scmp.ne.s32.totalorder %s109, %s112
    %p121 = scmp.eq.s32.totalorder %s15, 1
    %p122 = por %p120, %p121
    %p123 = scmp.ne.s32.totalorder %s112, %s113
    %p124 = scmp.eq.s32.totalorder %s15, 0
    %p125 = por %p123, %p124
    %p126 = scmp.ne.s32.totalorder %s112, %s113
    %p127 = scmp.eq.s32.totalorder %s16, 1
    %p128 = por %p126, %p127
    %p130 = scmp.ne.s32.totalorder %s113, %s129
    %p131 = scmp.eq.s32.totalorder %s16, 0
    %p132 = por %p130, %p131
    %p133 = scmp.le.s32.totalorder 1, %s10
    %p134 = scmp.lt.s32.totalorder %s10, 3
    %p135 = pnand %p133, %p134
    %p136 = pneg %p135
    // Predicated region
    $region9: #{dw_embedded_forward.3} parent=5 // pred_check
      _
    $region10: #{dw_embedded_forward.3} parent=5 // pred_check_branch
      %138 = sbr.rel (%p135) target = $region12
    $region11: #{dw_embedded_forward.3} parent=5 // pred_region
      %s139 = ssub.s32 %s10, 1
      // Predicated region
      $region13: #{dw_embedded_forward.3} parent=11 // pred_check
        %p140 = pneg %p57
      $region14: #{dw_embedded_forward.3} parent=11 // pred_check_branch
        %142 = sbr.rel (%p140) target = $region16
      $region15: #{dw_embedded_forward.3} parent=11 // pred_region
        _
      $region16: #{dw_embedded_forward.3} parent=11 // pred_fallthru
        _
      // Predicated region
      $region17: #{dw_embedded_forward.3} parent=11 // pred_check
        %p143 = pneg %p78
      $region18: #{dw_embedded_forward.3} parent=11 // pred_check_branch
        %145 = sbr.rel (%p143) target = $region20
      $region19: #{dw_embedded_forward.3} parent=11 // pred_region
        _
      $region20: #{dw_embedded_forward.3} parent=11 // pred_fallthru
        _
      // Predicated region
      $region21: #{dw_embedded_forward.3} parent=11 // pred_check
        %p146 = pneg %p99
      $region22: #{dw_embedded_forward.3} parent=11 // pred_check_branch
        %148 = sbr.rel (%p146) target = $region24
      $region23: #{dw_embedded_forward.3} parent=11 // pred_region
        _
      $region24: #{dw_embedded_forward.3} parent=11 // pred_fallthru
        _
    $region12: #{dw_embedded_forward.3} parent=5 // pred_fallthru
      _
    %p149 = scmp.lt.s32.totalorder %s10, 2
    // Predicated region
    $region25: #{dw_embedded_forward.3} parent=5 // pred_check
      %p150 = pneg %p149
    $region26: #{dw_embedded_forward.3} parent=5 // pred_check_branch
      %152 = sbr.rel (%p150) target = $region28
    $region27: #{dw_embedded_forward.3} parent=5 // pred_region
      // Predicated region
      $region29: #{dw_embedded_forward.3} parent=27 // pred_check
        %p153 = pneg %p30
      $region30: #{dw_embedded_forward.3} parent=27 // pred_check_branch
        %155 = sbr.rel (%p153) target = $region32
      $region31: #{dw_embedded_forward.3} parent=27 // pred_region
        %p156 = scmp.lt.s32.totalorder %s10, 1
        %s157 = scalar_select %p156, %s10, 1
        %s158 = smul.addr %s157, 40
        %s159 = smul.addr %s158, 8
        %s160 = scalar_lea.vmem %s0, %s159
      $region32: #{dw_embedded_forward.3} parent=27 // pred_fallthru
        _
    $region28: #{dw_embedded_forward.3} parent=5 // pred_fallthru
      _
    %p161 = scmp.le.s32.totalorder 1, %s10
    %p162 = scmp.lt.s32.totalorder %s10, 3
    %p163 = pnand %p161, %p162
    %p164 = pneg %p163
    // Predicated region
    $region33: #{dw_embedded_forward.3} parent=5 // pred_check
      _
    $region34: #{dw_embedded_forward.3} parent=5 // pred_check_branch
      %166 = sbr.rel (%p163) target = $region36
    $region35: #{dw_embedded_forward.3} parent=5 // pred_region
      %s167 = ssub.s32 %s10, 1
      %p168 = scmp.lt.s32.totalorder %s15, 1
      %s169 = scalar_select %p168, %s15, 1
      %s170 = smul.addr %s169, 40
      %s171 = smul.addr %s170, 8
      %s172 = scalar_lea.vmem %s0, %s171
      %p173 = pneg %p36
      %p174 = pneg %p33
      %p175 = pneg %p57
      %p176 = pneg %p54
      %p177 = pneg %p78
      %p178 = pneg %p75
      %p179 = pneg %p99
      %p180 = pneg %p96
      %p181 = pneg %p125
      %p182 = pneg %p122
      %p183 = scmp.lt.s32.totalorder %s15, 1
      %s184 = scalar_select %p183, %s15, 1
      %s185 = smul.addr %s184, 4
      %s186 = smul.addr %s185, 8
      %s187 = scalar_lea.vmem %s4, %s186
      %p188 = scmp.lt.s32.totalorder %s15, 1
      %s189 = scalar_select %p188, %s15, 1
      %s190 = smul.addr %s189, 40
      %s191 = smul.addr %s190, 8
      %s192 = scalar_lea.vmem %s0, %s191
      %p193 = scmp.lt.s32.totalorder %s15, 1
      %s194 = scalar_select %p193, %s15, 1
      %s195 = smul.addr %s194, 4
      %s196 = smul.addr %s195, 8
      %s197 = scalar_lea.vmem %s4, %s196
      %v199 = vld [vmem:[%s192 + $0x10] sm:$0xff]
      %v200 = vld [vmem:[%s192 + $0x18] sm:$0x1]
      %v201 = vld [vmem:[%s192 + $0x20] sm:$0xff]
      %v202 = vld [vmem:[%s192 + $0x28] sm:$0x1]
      %v203 = vld [vmem:[%s192 + $0x30] sm:$0xff]
      %v204 = vld [vmem:[%s192 + $0x38] sm:$0x1]
      %v205 = vld [vmem:[%s192 + $0x40] sm:$0xff]
      %v206 = vld [vmem:[%s192 + $0x48] sm:$0x1]
      %v207 = vld [vmem:[%s192 + $0x60] sm:$0xff]
      %v208 = vld [vmem:[%s192 + $0x68] sm:$0x1]
      %v209 = vld [vmem:[%s192 + $0x70] sm:$0xff]
      %v210 = vld [vmem:[%s192 + $0x78] sm:$0x1]
      %v211 = vld [vmem:[%s192 + $0x80] sm:$0xff]
      %v212 = vld [vmem:[%s192 + $0x88] sm:$0x1]
      %v213 = vld [vmem:[%s192 + $0x90] sm:$0xff]
      %v214 = vld [vmem:[%s192 + $0x98] sm:$0x1]
      %v215 = vld [vmem:[%s192 + $0xa0] sm:$0xff]
      %v216 = vld [vmem:[%s192 + $0xa8] sm:$0x1]
      %v217 = vld [vmem:[%s192 + $0xb0] sm:$0xff]
      %v218 = vld [vmem:[%s192 + $0xb8] sm:$0x1]
      %v219 = vld [vmem:[%s192 + $0xc0] sm:$0xff]
      %v220 = vld [vmem:[%s192 + $0xc8] sm:$0x1]
      %v221 = vld [vmem:[%s192 + $0xd0] sm:$0xff]
      %v222 = vld [vmem:[%s192 + $0xd8] sm:$0x1]
      %v223 = vld [vmem:[%s192 + $0xe0] sm:$0xff]
      %v224 = vld [vmem:[%s192 + $0xe8] sm:$0x1]
      %v225 = vld [vmem:[%s192 + $0xf0] sm:$0xff]
      %v226 = vld [vmem:[%s192 + $0xf8] sm:$0x1]
      %v227 = vld [vmem:[%s192 + $0x100] sm:$0xff]
      %v228 = vld [vmem:[%s192 + $0x108] sm:$0x1]
      %v229 = vld [vmem:[%s192 + $0x110] sm:$0xff]
      %v230 = vld [vmem:[%s192 + $0x118] sm:$0x1]
      %v231 = vld [vmem:[%s192 + $0x120] sm:$0xff]
      %v232 = vld [vmem:[%s192 + $0x128] sm:$0x1]
      %v233 = vld [vmem:[%s192 + $0x130] sm:$0xff]
      %v234 = vld [vmem:[%s192 + $0x138] sm:$0x1]
      %vm243 = vcmask 1046528
      %v244 = vrot.slane %v215, 1
      %v245 = vrot.slane %v216, 1
      %v246 = vsel %vm243, %v244, %v245
      %v247 = vrot.slane %v217, 1
      %v248 = vrot.slane %v218, 1
      %v249 = vsel %vm243, %v247, %v248
      %v250 = vrot.slane %v219, 1
      %v251 = vrot.slane %v220, 1
      %v252 = vsel %vm243, %v250, %v251
      %v253 = vrot.slane %v221, 1
      %v254 = vrot.slane %v222, 1
      %v255 = vsel %vm243, %v253, %v254
      %256 = vrot.lane.b32.xlu0 %v246, 32
      %v257 = vpop.permute.xlu0 %256
      %258 = vrot.lane.b32.xlu0 %v249, 32
      %v259 = vpop.permute.xlu0 %258
      %260 = vrot.lane.b32.xlu0 %v252, 32
      %v261 = vpop.permute.xlu0 %260
      %262 = vrot.lane.b32.xlu0 %v255, 32
      %v263 = vpop.permute.xlu0 %262
      %v276 = vrot.slane %v225, 1
      %v277 = vrot.slane %v226, 1
      %v278 = vsel %vm243, %v276, %v277
      %v279 = vrot.slane %v227, 1
      %v280 = vrot.slane %v228, 1
      %v281 = vsel %vm243, %v279, %v280
      %v282 = vrot.slane %v229, 1
      %v283 = vrot.slane %v230, 1
      %v284 = vsel %vm243, %v282, %v283
      %v285 = vrot.slane %v231, 1
      %v286 = vrot.slane %v232, 1
      %v287 = vsel %vm243, %v285, %v286
      %288 = vrot.lane.b32.xlu0 %v278, 64
      %v289 = vpop.permute.xlu0 %288
      %290 = vrot.lane.b32.xlu0 %v281, 64
      %v291 = vpop.permute.xlu0 %290
      %292 = vrot.lane.b32.xlu0 %v284, 64
      %v293 = vpop.permute.xlu0 %292
      %294 = vrot.lane.b32.xlu0 %v287, 64
      %v295 = vpop.permute.xlu0 %294
      %304 = vrot.lane.b32.xlu0 %v207, 96
      %v305 = vpop.permute.xlu0 %304
      %306 = vrot.lane.b32.xlu0 %v209, 96
      %v307 = vpop.permute.xlu0 %306
      %308 = vrot.lane.b32.xlu0 %v211, 96
      %v309 = vpop.permute.xlu0 %308
      %310 = vrot.lane.b32.xlu0 %v213, 96
      %v311 = vpop.permute.xlu0 %310
      %v324 = vrot.slane %v199, 1
      %v325 = vrot.slane %v200, 1
      %v326 = vsel %vm243, %v324, %v325
      %v327 = vrot.slane %v201, 1
      %v328 = vrot.slane %v202, 1
      %v329 = vsel %vm243, %v327, %v328
      %v330 = vrot.slane %v203, 1
      %v331 = vrot.slane %v204, 1
      %v332 = vsel %vm243, %v330, %v331
      %v333 = vrot.slane %v205, 1
      %v334 = vrot.slane %v206, 1
      %v335 = vsel %vm243, %v333, %v334
      %v344 = vrot.slane %v207, 1
      %v345 = vrot.slane %v208, 1
      %v346 = vsel %vm243, %v344, %v345
      %v347 = vrot.slane %v209, 1
      %v348 = vrot.slane %v210, 1
      %v349 = vsel %vm243, %v347, %v348
      %v350 = vrot.slane %v211, 1
      %v351 = vrot.slane %v212, 1
      %v352 = vsel %vm243, %v350, %v351
      %v353 = vrot.slane %v213, 1
      %v354 = vrot.slane %v214, 1
      %v355 = vsel %vm243, %v353, %v354
      %356 = vrot.lane.b32.xlu0 %v346, 32
      %v357 = vpop.permute.xlu0 %356
      %358 = vrot.lane.b32.xlu0 %v349, 32
      %v359 = vpop.permute.xlu0 %358
      %360 = vrot.lane.b32.xlu0 %v352, 32
      %v361 = vpop.permute.xlu0 %360
      %362 = vrot.lane.b32.xlu0 %v355, 32
      %v363 = vpop.permute.xlu0 %362
      %369 = vrot.lane.b32.xlu0 %v227, 64
      %v370 = vpop.permute.xlu0 %369
      %371 = vrot.lane.b32.xlu0 %v229, 64
      %v372 = vpop.permute.xlu0 %371
      %373 = vrot.lane.b32.xlu0 %v231, 64
      %v374 = vpop.permute.xlu0 %373
      %375 = vrot.lane.b32.xlu0 %v233, 64
      %v376 = vpop.permute.xlu0 %375
      %v383 = vrot.slane %v223, 1
      %v384 = vrot.slane %v224, 1
      %v385 = vsel %vm243, %v383, %v384
      %386 = vrot.lane.b32.xlu0 %v249, 96
      %v387 = vpop.permute.xlu0 %386
      %388 = vrot.lane.b32.xlu0 %v252, 96
      %v389 = vpop.permute.xlu0 %388
      %390 = vrot.lane.b32.xlu0 %v255, 96
      %v391 = vpop.permute.xlu0 %390
      %392 = vrot.lane.b32.xlu0 %v385, 96
      %v393 = vpop.permute.xlu0 %392
      %v399 = vrot.slane %v233, 1
      %v400 = vrot.slane %v234, 1
      %v401 = vsel %vm243, %v399, %v400
      %vm406 = vcmask 261120
      %v407 = vsel %vm406, %v225, %v257
      %v408 = vsel %vm406, %v227, %v259
      %v409 = vsel %vm406, %v229, %v261
      %v410 = vsel %vm406, %v231, %v263
      %vm411 = vcmask 523264
      %v412 = vsel %vm411, %v407, %v289
      %v413 = vsel %vm411, %v408, %v291
      %v414 = vsel %vm411, %v409, %v293
      %v415 = vsel %vm411, %v410, %v295
      %vm416 = vcmask 785408
      %v417 = vsel %vm416, %v412, %v305
      %v418 = vsel %vm416, %v413, %v307
      %v419 = vsel %vm416, %v414, %v309
      %v420 = vsel %vm416, %v415, %v311
      %v421 = vsel %vm406, %v326, %v357
      %v422 = vsel %vm406, %v329, %v359
      %v423 = vsel %vm406, %v332, %v361
      %v424 = vsel %vm406, %v335, %v363
      %v425 = vsel %vm411, %v421, %v370
      %v426 = vsel %vm411, %v422, %v372
      %v427 = vsel %vm411, %v423, %v374
      %v428 = vsel %vm411, %v424, %v376
      %v429 = vsel %vm416, %v425, %v387
      %v430 = vsel %vm416, %v426, %v389
      %v431 = vsel %vm416, %v427, %v391
      %v432 = vsel %vm416, %v428, %v393
      %v433 = vpack.c.bf16 %v418, %v417
      %v434 = vpack.c.bf16 %v430, %v429
      %v435 = vpack.c.bf16 %v284, %v281
      %v436 = vpack.c.bf16 %v420, %v419
      %v437 = vpack.c.bf16 %v432, %v431
      %v438 = vpack.c.bf16 %v401, %v287
      %v439 = vld [vmem:[%s1] sm:$0xf]
      %v440 = vld [vmem:[%s1 + $0x4] sm:$0xf]
      %v441 = vld [vmem:[%s1 + $0x8] sm:$0xf]
      %v442 = vld [vmem:[%s1 + $0xc] sm:$0xf]
      %v443 = vld [vmem:[%s1 + $0x10] sm:$0xf]
      %v444 = vld [vmem:[%s1 + $0x14] sm:$0xf]
      %v445 = vld [vmem:[%s1 + $0x18] sm:$0xf]
      %v446 = vld [vmem:[%s1 + $0x1c] sm:$0xf]
      %v447 = vld [vmem:[%s1 + $0x20] sm:$0xf]
      %v448 = vld [vmem:[%s1 + $0x24] sm:$0xf]
      %v449 = vld [vmem:[%s1 + $0x28] sm:$0xf]
      %v450 = vld [vmem:[%s1 + $0x2c] sm:$0xf]
      %v451 = vld [vmem:[%s1 + $0x30] sm:$0xf]
      %v452 = vld [vmem:[%s1 + $0x34] sm:$0xf]
      %v453 = vld [vmem:[%s1 + $0x38] sm:$0xf]
      %v454 = vld [vmem:[%s1 + $0x3c] sm:$0xf]
      %v455 = vld [vmem:[%s1 + $0x40] sm:$0xf]
      %v456 = vld [vmem:[%s1 + $0x44] sm:$0xf]
      %v457 = vld [vmem:[%s1 + $0x48] sm:$0xf]
      %v458 = vld [vmem:[%s1 + $0x4c] sm:$0xf]
      %v459 = vld [vmem:[%s1 + $0x50] sm:$0xf]
      %v460 = vld [vmem:[%s1 + $0x54] sm:$0xf]
      %v461 = vld [vmem:[%s1 + $0x58] sm:$0xf]
      %v462 = vld [vmem:[%s1 + $0x5c] sm:$0xf]
      %v463 = vld [vmem:[%s1 + $0x60] sm:$0xf]
      %v464 = vld [vmem:[%s1 + $0x64] sm:$0xf]
      %v465 = vld [vmem:[%s1 + $0x68] sm:$0xf]
      %v466 = vld [vmem:[%s1 + $0x6c] sm:$0xf]
      %v467 = vld [vmem:[%s1 + $0x70] sm:$0xf]
      %v468 = vld [vmem:[%s1 + $0x74] sm:$0xf]
      %v469 = vld [vmem:[%s1 + $0x78] sm:$0xf]
      %v470 = vld [vmem:[%s1 + $0x7c] sm:$0xf]
      %v471 = vld [vmem:[%s1 + $0x80] sm:$0xf]
      %v472 = vld [vmem:[%s1 + $0x84] sm:$0xf]
      %v473 = vld [vmem:[%s1 + $0x88] sm:$0xf]
      %v474 = vld [vmem:[%s1 + $0x8c] sm:$0xf]
      %v511 = vunpack.c.l.b16 %v439
      %v512 = vunpack.c.l.b16 %v440
      %v513 = vunpack.c.l.b16 %v441
      %v514 = vunpack.c.l.b16 %v442
      %v515 = vunpack.c.l.b16 %v443
      %v516 = vunpack.c.l.b16 %v444
      %v517 = vunpack.c.l.b16 %v445
      %v518 = vunpack.c.l.b16 %v446
      %v519 = vunpack.c.l.b16 %v447
      %v520 = vunpack.c.l.b16 %v448
      %v521 = vunpack.c.l.b16 %v449
      %v522 = vunpack.c.l.b16 %v450
      %v523 = vunpack.c.l.b16 %v451
      %v524 = vunpack.c.l.b16 %v452
      %v525 = vunpack.c.l.b16 %v453
      %v526 = vunpack.c.l.b16 %v454
      %v527 = vunpack.c.l.b16 %v455
      %v528 = vunpack.c.l.b16 %v456
      %v529 = vunpack.c.l.b16 %v457
      %v530 = vunpack.c.l.b16 %v458
      %v531 = vunpack.c.l.b16 %v459
      %v532 = vunpack.c.l.b16 %v460
      %v533 = vunpack.c.l.b16 %v461
      %v534 = vunpack.c.l.b16 %v462
      %v535 = vunpack.c.l.b16 %v463
      %v536 = vunpack.c.l.b16 %v464
      %v537 = vunpack.c.l.b16 %v465
      %v538 = vunpack.c.l.b16 %v466
      %v539 = vunpack.c.l.b16 %v467
      %v540 = vunpack.c.l.b16 %v468
      %v541 = vunpack.c.l.b16 %v469
      %v542 = vunpack.c.l.b16 %v470
      %v543 = vunpack.c.l.b16 %v471
      %v544 = vunpack.c.l.b16 %v472
      %v545 = vunpack.c.l.b16 %v473
      %v546 = vunpack.c.l.b16 %v474
      %v547 = vpack.c.b16 %v512, %v511
      %v548 = vpack.c.b16 %v514, %v513
      %v549 = vpack.c.b16 %v516, %v515
      %v550 = vpack.c.b16 %v518, %v517
      %v551 = vpack.c.b16 %v520, %v519
      %v552 = vpack.c.b16 %v522, %v521
      %v553 = vpack.c.b16 %v524, %v523
      %v554 = vpack.c.b16 %v526, %v525
      %v555 = vpack.c.b16 %v528, %v527
      %v556 = vpack.c.b16 %v530, %v529
      %v557 = vpack.c.b16 %v532, %v531
      %v558 = vpack.c.b16 %v534, %v533
      %v559 = vpack.c.b16 %v536, %v535
      %v560 = vpack.c.b16 %v538, %v537
      %v561 = vpack.c.b16 %v540, %v539
      %v562 = vpack.c.b16 %v542, %v541
      %v563 = vpack.c.b16 %v544, %v543
      %v564 = vpack.c.b16 %v546, %v545
      %v584 = vsel %vm406, %v435, 0
      %v587 = vsel %vm406, %v438, 0
      %589 = vmatprep.subr.bf16.mxu0 0
      %590 = vmatpush1.bf16.msra.mxu0 %v554
      %591 = vmatprep.subr.bf16.mxu0 0
      %592 = vmatpush1.bf16.msra.mxu0 %v553
      %593 = vmatprep.subr.bf16.mxu0 0
      %594 = vmatpush1.bf16.msra.mxu0 %v552
      %595 = vmatprep.subr.bf16.mxu0 0
      %596 = vmatpush1.bf16.msra.mxu0 %v551
      %597 = vmatprep.subr.bf16.mxu0 0
      %598 = vmatpush1.bf16.msra.mxu0 %v550
      %599 = vmatprep.subr.bf16.mxu0 0
      %600 = vmatpush1.bf16.msra.mxu0 %v549
      %601 = vmatprep.subr.bf16.mxu0 0
      %602 = vmatpush1.bf16.msra.mxu0 %v548
      %603 = vmatprep.subr.bf16.mxu0 0
      %604 = vmatpush1.bf16.msra.mxu0 %v547
      %605 = vmatprep.subr.bf16.mxu0 0
      %606 = vmatpush2.bf16.msra.mxu0 %v562
      %607 = vmatprep.subr.bf16.mxu0 0
      %608 = vmatpush2.bf16.msra.mxu0 %v561
      %609 = vmatprep.subr.bf16.mxu0 0
      %610 = vmatpush2.bf16.msra.mxu0 %v560
      %611 = vmatprep.subr.bf16.mxu0 0
      %612 = vmatpush2.bf16.msra.mxu0 %v559
      %613 = vmatprep.subr.bf16.mxu0 0
      %614 = vmatpush2.bf16.msra.mxu0 %v558
      %615 = vmatprep.subr.bf16.mxu0 0
      %616 = vmatpush2.bf16.msra.mxu0 %v557
      %617 = vmatprep.subr.bf16.mxu0 0
      %618 = vmatpush2.bf16.msra.mxu0 %v556
      %619 = vmatprep.subr.bf16.mxu0 0
      %620 = vmatpush2.bf16.msra.mxu0 %v555
      %621 = vmatprep.mubr.bf16.mxu0 %v434
      %622 = vmatmul.mubr.bf16.gmra.mxu0 %v433
      %v623 = vpop.f32.mrf.mxu0
      %v624 = vadd.f32 0.0, %v623
      %v625 = vpop.f32.mrf.mxu0
      %v626 = vpop.f32.mrf.mxu0
      %v627 = vadd.f32 0.0, %v626
      %v628 = vpop.f32.mrf.mxu0
      %629 = vmatprep.mubr.bf16.mxu0 %v437
      %630 = vmatmul.mubr.bf16.gmra.mxu0 %v436
      %v631 = vpop.f32.mrf.mxu0
      %v632 = vadd.f32 0.0, %v631
      %v633 = vpop.f32.mrf.mxu0
      %v634 = vpop.f32.mrf.mxu0
      %v635 = vadd.f32 0.0, %v634
      %v636 = vpop.f32.mrf.mxu0
      %637 = vdwg.mxu0
      %638 = vmatprep.subr.bf16.mxu0 0
      %639 = vmatpush1.bf16.msra.mxu0 0
      %640 = vmatprep.subr.bf16.mxu0 0
      %641 = vmatpush1.bf16.msra.mxu0 0
      %642 = vmatprep.subr.bf16.mxu0 0
      %643 = vmatpush1.bf16.msra.mxu0 0
      %644 = vmatprep.subr.bf16.mxu0 0
      %645 = vmatpush1.bf16.msra.mxu0 0
      %646 = vmatprep.subr.bf16.mxu0 0
      %647 = vmatpush1.bf16.msra.mxu0 0
      %648 = vmatprep.subr.bf16.mxu0 0
      %649 = vmatpush1.bf16.msra.mxu0 0
      %650 = vmatprep.subr.bf16.mxu0 0
      %651 = vmatpush1.bf16.msra.mxu0 %v564
      %652 = vmatprep.subr.bf16.mxu0 0
      %653 = vmatpush1.bf16.msra.mxu0 %v563
      %654 = vmatprep.subr.bf16.mxu0 0
      %655 = vmatpush2.bf16.msra.mxu0 0
      %656 = vmatprep.subr.bf16.mxu0 0
      %657 = vmatpush2.bf16.msra.mxu0 0
      %658 = vmatprep.subr.bf16.mxu0 0
      %659 = vmatpush2.bf16.msra.mxu0 0
      %660 = vmatprep.subr.bf16.mxu0 0
      %661 = vmatpush2.bf16.msra.mxu0 0
      %662 = vmatprep.subr.bf16.mxu0 0
      %663 = vmatpush2.bf16.msra.mxu0 0
      %664 = vmatprep.subr.bf16.mxu0 0
      %665 = vmatpush2.bf16.msra.mxu0 0
      %666 = vmatprep.subr.bf16.mxu0 0
      %667 = vmatpush2.bf16.msra.mxu0 0
      %668 = vmatprep.subr.bf16.mxu0 0
      %669 = vmatpush2.bf16.msra.mxu0 0
      %670 = vmatprep.mubr.bf16.mxu0 0
      %671 = vmatmul.mubr.bf16.gmra.mxu0 %v584
      %v672 = vpop.f32.mrf.mxu0
      %v673 = vadd.f32 %v624, %v672
      %v674 = vpop.f32.mrf.mxu0
      %v675 = vpop.f32.mrf.mxu0
      %v676 = vadd.f32 %v627, %v675
      %v677 = vpop.f32.mrf.mxu0
      %678 = vmatprep.mubr.bf16.mxu0 0
      %679 = vmatmul.mubr.bf16.gmra.mxu0 %v587
      %v680 = vpop.f32.mrf.mxu0
      %v681 = vadd.f32 %v632, %v680
      %v682 = vpop.f32.mrf.mxu0
      %v683 = vpop.f32.mrf.mxu0
      %v684 = vadd.f32 %v635, %v683
      %v685 = vpop.f32.mrf.mxu0
      %686 = vdwg.mxu0
      %v687 = vld [vmem:[%s2] sm:$0x1]
      %v689 = vlaneseq
      %v690 = vshrl.u32 %v689, 7
      %v691 = vsub.s32 0, %v690
      %v692 = vrot.slane %v687, %v691
      %v694 = vmul.f32 %v673, %v692
      %v695 = vmul.f32 %v676, %v692
      %v696 = vmul.f32 %v681, %v692
      %v697 = vmul.f32 %v684, %v692
      %v698 = vld [vmem:[%s3] sm:$0x1]
      %v700 = vlaneseq
      %v701 = vshrl.u32 %v700, 7
      %v702 = vsub.s32 0, %v701
      %v703 = vrot.slane %v698, %v702
      %v705 = vadd.f32 %v694, %v703
      %v706 = vadd.f32 %v695, %v703
      %v707 = vadd.f32 %v696, %v703
      %v708 = vadd.f32 %v697, %v703
      %709 = vst.msk [vmem:[%s197] sm:$0xff] %vm406, %v705
      %710 = vst.msk [vmem:[%s197 + $0x8] sm:$0xff] %vm406, %v706
      %711 = vst.msk [vmem:[%s197 + $0x10] sm:$0xff] %vm406, %v707
      %712 = vst.msk [vmem:[%s197 + $0x18] sm:$0xff] %vm406, %v708
      %p713 = scmp.lt.s32.totalorder %s15, 1
      %s714 = scalar_select %p713, %s15, 1
      %s715 = smul.addr %s714, 4
      %s716 = smul.addr %s715, 8
      %s717 = scalar_lea.vmem %s4, %s716
      // Predicated region
      $region37: #{dw_embedded_forward.3} parent=35 // pred_check
        %p718 = pneg %p122
      $region38: #{dw_embedded_forward.3} parent=35 // pred_check_branch
        %720 = sbr.rel (%p718) target = $region40
      $region39: #{dw_embedded_forward.3} parent=35 // pred_region
        _
      $region40: #{dw_embedded_forward.3} parent=35 // pred_fallthru
        _
    $region36: #{dw_embedded_forward.3} parent=5 // pred_fallthru
      _
    %p721 = scmp.le.s32.totalorder 2, %s10
    // Predicated region
    $region41: #{dw_embedded_forward.3} parent=5 // pred_check
      %p722 = pneg %p721
    $region42: #{dw_embedded_forward.3} parent=5 // pred_check_branch
      %724 = sbr.rel (%p722) target = $region44
    $region43: #{dw_embedded_forward.3} parent=5 // pred_region
      %s725 = ssub.s32 %s10, 2
      // Predicated region
      $region45: #{dw_embedded_forward.3} parent=43 // pred_check
        %p726 = pneg %p128
      $region46: #{dw_embedded_forward.3} parent=43 // pred_check_branch
        %728 = sbr.rel (%p726) target = $region48
      $region47: #{dw_embedded_forward.3} parent=43 // pred_region
        %p729 = scmp.lt.s32.totalorder %s16, 1
        %s730 = scalar_select %p729, %s16, 1
        %s731 = smul.addr %s730, 4
        %s732 = smul.addr %s731, 8
        %s733 = scalar_lea.vmem %s4, %s732
      $region48: #{dw_embedded_forward.3} parent=43 // pred_fallthru
        _
    $region44: #{dw_embedded_forward.3} parent=5 // pred_fallthru
      _
  $region6: #{dw_embedded_forward.3} parent=0 // loop_footer
    %s14 = sadd.s32 1, %s10
  $region7: #{dw_embedded_forward.3} parent=0 // loop_footer_branch
    %9 = sbr.rel target = $region3
  $region8: #{dw_embedded_forward.3} parent=0 // loop_exit
    _

</llo_original>
